<compile_context>
chip_gen: v6e
topology: v6e:2x2x1
jax: 0.10.0
libtpu: 0.0.40
codegen_flags: <defaults>
</compile_context>

<pallas_src>
import jax
import jax.numpy as jnp
import numpy as np
from jax import lax
from jax.experimental import pallas as pl
from jax.experimental.pallas import tpu as pltpu

# ----- module hyperparameters (ResNet1dBNDecBlock.__init__) -----
IN_CHANNELS = 16
CHANNELS = 32
KERNEL_SIZE = 3
STRIDE = 2                       # subpixel upsample factor
DILATION = 1
EXPANSION = 4
BN_CH = CHANNELS // EXPANSION    # bottleneck channels = 8
PAD = DILATION * (KERNEL_SIZE - 1) // 2
BN_EPS = 1e-5

# Matmul operand dtype.  float32 keeps the self-check against the f32 reference
# tight (2e-4).  On v6e/v7x flip to jnp.bfloat16: halves x HBM traffic and the
# roll/mask/concat vreg count and runs the MXU at native bf16 rate (tolerances
# then loosen to ~1e-2).  On v5e keep element-wise math in f32 (no bf16 VALU);
# bf16 MXU operands are still legal there.
DOT_DTYPE = jnp.float32


def _relu6(x):
    return jnp.clip(x, 0.0, 6.0)


def _fold_bn(gamma, beta, mean, var, eps=BN_EPS):
    scale = gamma / jnp.sqrt(var + eps)
    shift = beta - mean * scale
    return scale, shift


def _tap_offsets():
    return [j * DILATION - PAD for j in range(KERNEL_SIZE)]


def _pick_samples_per_step(B, L, target_lanes=4096):
    """Largest TB with B % TB == 0, TB*L % 128 == 0, TB*L <= target_lanes and,
    when possible, at least 2 grid steps (keeps both v7x TensorCores busy)."""
    valid = [tb for tb in range(1, B + 1)
             if B % tb == 0 and (tb * L) % 128 == 0]
    if not valid:
        raise ValueError(
            "no samples_per_step satisfies samples_per_step*L % 128 == 0; "
            "pad L (or B) so a per-step slab of >=128 lanes exists")
    pref = [tb for tb in valid if tb * L <= target_lanes and B // tb >= 2]
    return max(pref) if pref else min(valid)


def _make_kernel(TBL):
    """Kernel over one (Cin, TBL) slab of TB samples (lane axis = TB*L)."""
    offsets = _tap_offsets()

    def kernel(x_ref, w1up_ref, w2_ref, w3_ref, bias_ref, mask_ref, o_ref):
        xb = x_ref[...]                                        # (Cin, TBL)
        b1 = bias_ref[0:BN_CH, :]                              # (BN_CH, 1)
        b2 = bias_ref[BN_CH:BN_CH + STRIDE * BN_CH, :]         # (S*BN_CH, 1)
        b34 = bias_ref[BN_CH + STRIDE * BN_CH:, :]             # (S*CH, 1)

        # Shared-x matmul: one stacked (BN_CH + S*CH, Cin) weight feeds both
        # conv1 (rows 0:BN_CH, bn1 scale folded) and the folded
        # bn_up + nearest-upsample shortcut (rows BN_CH:), so x goes through
        # the MXU once (one weight staging, one result pop).
        hp = jnp.dot(w1up_ref[...], xb, preferred_element_type=jnp.float32)
        h = _relu6(hp[0:BN_CH, :] + b1)                        # (BN_CH, TBL) f32
        r = hp[BN_CH:, :]                                      # (S*CH, TBL)  f32

        # conv2: all K dilated taps fused into ONE dot against a stacked
        # (K*BN_CH, TBL) operand.  Shifts use pltpu.roll (XLU slot) with
        # non-negative modular shifts; per-sample zero padding comes from the
        # precomputed 0/1 boundary masks (no in-kernel iota / mod / compare).
        h = h.astype(DOT_DTYPE)
        msk = mask_ref[...]                                    # (K, TBL)
        taps = []
        for j, off in enumerate(offsets):                      # static unroll
            if off == 0:
                taps.append(h)
            else:
                hj = pltpu.roll(h, (-off) % TBL, axis=1)       # col q <- h[:, q+off]
                taps.append(hj * msk[j:j + 1, :])
        hcat = jnp.concatenate(taps, axis=0) if len(taps) > 1 else taps[0]
        y = _relu6(jnp.dot(w2_ref[...], hcat,
                           preferred_element_type=jnp.float32) + b2)

        # conv3 (bn3 folded, subpixel shuffle fused via block-diagonal weight)
        # + shortcut + packed bn3/bn_up shifts + relu6; lane-dense store.
        z = jnp.dot(w3_ref[...], y.astype(DOT_DTYPE),
                    preferred_element_type=jnp.float32)        # (S*CH, TBL)
        o_ref[...] = _relu6(z + r + b34).astype(o_ref.dtype)

    return kernel


def resnet1d_bn_dec_block(x_ncl, params, samples_per_step=None,
                          out_dtype=jnp.float32, return_kernel_layout=False):
    """x_ncl: (B, IN_CHANNELS, L) -> (B, CHANNELS, L*STRIDE) float (NCL).

    return_kernel_layout=True skips the post-kernel permutation and returns the
    raw (STRIDE*CHANNELS, B*L) slab with
        raw[s*CHANNELS + o, b*L + l] == out[b, o, l*STRIDE + s];
    downstream Pallas consumers can fold that permutation into their own
    BlockSpec index_map instead of paying an extra HBM round trip here.
    """
    B, Cin, L = x_ncl.shape
    assert Cin == IN_CHANNELS
    assert PAD < L, "conv2 context must be smaller than the sequence length"
    TB = (samples_per_step if samples_per_step is not None
          else _pick_samples_per_step(B, L))
    assert B % TB == 0, "batch must be divisible by samples_per_step"
    TBL = TB * L
    assert TBL % 128 == 0, "samples_per_step * L must be a multiple of 128 lanes"
    # VMEM note: per step the kernel holds ~(Cin + 3*S*CH + K*BN_CH)*TBL*4 B of
    # blocks + intermediates; at the default TBL target (<= 4096 lanes) this is
    # well under the 32 MiB scoped default even on v7x (64 MiB VMEM).  If you
    # raise target_lanes toward 8K-16K, also set
    # pltpu.CompilerParams(vmem_limit_bytes=...) with headroom and consider
    # pipeline_mode=pl.Buffered(3) on the x spec if its DMA stays exposed.

    # ----- glue: fold BN scales into weights, fuse shuffle / upsample (XLA) ---
    s1, b1 = _fold_bn(*params["bn1"])
    s2, b2 = _fold_bn(*params["bn2"])
    s3, b3 = _fold_bn(*params["bn3"])
    sup, bup = _fold_bn(*params["bnup"])

    # conv1 and the upsample shortcut share x: stack both folded weights.
    w1f = s1[:, None] * params["W1"]                              # (BN_CH, Cin)
    wupf = sup[:, None] * params["Wup"]                           # (CH, Cin)
    wupbig = jnp.tile(wupf, (STRIDE, 1))                          # (S*CH, Cin): nearest upsample
    w1up = jnp.concatenate([w1f, wupbig], axis=0).astype(DOT_DTYPE)   # (72, Cin)

    # conv2 taps: torch W2 is (BN_CH*S, BN_CH, K); conv output channel c*S + s
    # carries bn2 scale/shift of post-shuffle channel c.  All K taps are
    # concatenated along the contraction axis for a single fused dot.
    s2r = jnp.repeat(s2, STRIDE)
    b2r = jnp.repeat(b2, STRIDE)
    w2s = s2r[:, None, None] * params["W2"]                       # (S*BN_CH, BN_CH, K)
    w2cat = jnp.transpose(w2s, (0, 2, 1)).reshape(
        STRIDE * BN_CH, KERNEL_SIZE * BN_CH).astype(DOT_DTYPE)    # (16, 24)

    # conv3 fused with the subpixel shuffle: block-diagonal weight keeps the
    # result laid out as rows (s*CHANNELS + o) over columns (sample, l).
    w3f = s3[:, None] * params["W3"]                              # (CH, BN_CH)
    eye = jnp.eye(STRIDE, dtype=w3f.dtype)
    w3big = (eye[:, None, None, :] * w3f[None, :, :, None]).reshape(
        STRIDE * CHANNELS, STRIDE * BN_CH).astype(DOT_DTYPE)      # (64, 16)

    # Remaining BN shift vectors packed into one tiny resident array; bn3 and
    # bn_up shifts are summed since both land on the final add.
    bias = jnp.concatenate(
        [b1, b2r, jnp.tile(b3, STRIDE) + jnp.tile(bup, STRIDE)])
    bias = bias.reshape(-1, 1).astype(jnp.float32)                # (88, 1)

    # Per-tap validity masks, hoisted out of the kernel (no per-step iota/mod);
    # they also kill cross-sample contamination from the folded lane axis.
    pos = np.arange(TBL) % L
    rows = []
    for off in _tap_offsets():
        if off < 0:
            rows.append(pos >= -off)
        elif off > 0:
            rows.append(pos < L - off)
        else:
            rows.append(np.ones(TBL, dtype=bool))
    masks = jnp.asarray(np.stack(rows).astype(np.float32)).astype(DOT_DTYPE)

    # channels-first, batch folded onto the lane axis: (Cin, B*L)
    x2 = jnp.transpose(x_ncl, (1, 0, 2)).reshape(Cin, B * L).astype(DOT_DTYPE)

    def _const_spec(shape):
        n = len(shape)
        return pl.BlockSpec(shape, lambda i: (0,) * n)

    macs_per_col = ((BN_CH + STRIDE * CHANNELS) * Cin
                    + STRIDE * BN_CH * KERNEL_SIZE * BN_CH
                    + STRIDE * CHANNELS * STRIDE * BN_CH)
    in_bytes = jnp.dtype(DOT_DTYPE).itemsize
    cost = pl.CostEstimate(
        flops=int(2 * macs_per_col * B * L),
        transcendentals=0,
        bytes_accessed=int(
            x2.size * in_bytes
            + STRIDE * CHANNELS * B * L * jnp.dtype(out_dtype).itemsize
            + (w1up.size + w2cat.size + w3big.size + masks.size) * in_bytes
            + bias.size * 4))

    out2 = pl.pallas_call(
        _make_kernel(TBL),
        out_shape=jax.ShapeDtypeStruct((STRIDE * CHANNELS, B * L), out_dtype),
        grid=(B // TB,),
        in_specs=[
            pl.BlockSpec((Cin, TBL), lambda i: (0, i)),
            _const_spec(w1up.shape),
            _const_spec(w2cat.shape),
            _const_spec(w3big.shape),
            _const_spec(bias.shape),
            _const_spec(masks.shape),
        ],
        out_specs=pl.BlockSpec((STRIDE * CHANNELS, TBL), lambda i: (0, i)),
        compiler_params=pltpu.CompilerParams(
            dimension_semantics=("parallel",)),
        cost_estimate=cost,
    )(x2, w1up, w2cat, w3big, bias, masks)

    if return_kernel_layout:
        return out2
    # out2[s*CHANNELS + o, b*L + l] == out[b, o, l*STRIDE + s]  ->  NCL
    return (out2.reshape(STRIDE, CHANNELS, B, L)
            .transpose(2, 1, 3, 0)
            .reshape(B, CHANNELS, L * STRIDE))


# ----- pure-JAX f32 reference mirroring the PyTorch forward (NCL layout) -----
def _reference(x, params):
    def bn(h, gamma, beta, mean, var):
        return (gamma[None, :, None] * (h - mean[None, :, None])
                / jnp.sqrt(var[None, :, None] + BN_EPS) + beta[None, :, None])

    def conv1x1(h, W):
        return jnp.einsum("oc,bcl->bol", W, h)

    h = jnp.clip(bn(conv1x1(x, params["W1"]), *params["bn1"]), 0.0, 6.0)
    h2 = lax.conv_general_dilated(
        h, params["W2"], window_strides=(1,), padding=[(PAD, PAD)],
        rhs_dilation=(DILATION,), dimension_numbers=("NCH", "OIH", "NCH"))
    B, Cr, L = h2.shape
    h2 = (h2.reshape(B, Cr // STRIDE, STRIDE, L)
            .transpose(0, 1, 3, 2).reshape(B, Cr // STRIDE, L * STRIDE))
    h2 = jnp.clip(bn(h2, *params["bn2"]), 0.0, 6.0)
    h3 = bn(conv1x1(h2, params["W3"]), *params["bn3"])
    res = bn(conv1x1(x, params["Wup"]), *params["bnup"])
    res = jnp.repeat(res, STRIDE, axis=2)
    return jnp.clip(h3 + res, 0.0, 6.0)


if __name__ == "__main__":
    key = jax.random.PRNGKey(0)
    ks = jax.random.split(key, 16)
    # B=8, L=128: samples_per_step auto-picks TB=4 -> 512-lane steps, a 2-step
    # "parallel" grid (both v7x TensorCores busy), lane-dense (64, 512) stores.
    B, L = 8, 128

    x = jax.random.normal(ks[0], (B, IN_CHANNELS, L), dtype=jnp.float32)

    def bn_params(k, c):
        k1, k2, k3, k4 = jax.random.split(k, 4)
        gamma = 1.0 + 0.1 * jax.random.normal(k1, (c,), dtype=jnp.float32)
        beta = 0.1 * jax.random.normal(k2, (c,), dtype=jnp.float32)
        mean = 0.1 * jax.random.normal(k3, (c,), dtype=jnp.float32)
        var = jax.random.uniform(k4, (c,), minval=0.5, maxval=1.5,
                                 dtype=jnp.float32)
        return (gamma, beta, mean, var)

    params = {
        "W1": 0.3 * jax.random.normal(ks[1], (BN_CH, IN_CHANNELS), jnp.float32),
        "W2": 0.3 * jax.random.normal(
            ks[2], (BN_CH * STRIDE, BN_CH, KERNEL_SIZE), jnp.float32),
        "W3": 0.3 * jax.random.normal(ks[3], (CHANNELS, BN_CH), jnp.float32),
        "Wup": 0.3 * jax.random.normal(ks[4], (CHANNELS, IN_CHANNELS), jnp.float32),
        "bn1": bn_params(ks[5], BN_CH),
        "bn2": bn_params(ks[6], BN_CH),
        "bn3": bn_params(ks[7], CHANNELS),
        "bnup": bn_params(ks[8], CHANNELS),
    }

    out = resnet1d_bn_dec_block(x, params)
    out = jax.block_until_ready(out)

    ref = _reference(x, params)
    np.testing.assert_allclose(np.asarray(out), np.asarray(ref),
                               rtol=2e-4, atol=2e-4)
    assert out.shape == (B, CHANNELS, L * STRIDE)
    print("KERNEL_OK")
</pallas_src>

<mosaic_0001>
module attributes {stable_mosaic.version = 11 : i64} {
  func.func @kernel(%arg0: i32, %arg1: memref<16x512xf32, #tpu.memory_space<vmem>>, %arg2: memref<72x16xf32, #tpu.memory_space<vmem>>, %arg3: memref<16x24xf32, #tpu.memory_space<vmem>>, %arg4: memref<64x16xf32, #tpu.memory_space<vmem>>, %arg5: memref<88x1xf32, #tpu.memory_space<vmem>>, %arg6: memref<3x512xf32, #tpu.memory_space<vmem>>, %arg7: memref<64x512xf32, #tpu.memory_space<vmem>>) attributes {dimension_semantics = [#tpu.dimension_semantics<parallel>], iteration_bounds = array<i64: 2>, scalar_prefetch = 0 : i64, scratch_operands = 0 : i64, tpu.core_type = #tpu.core_type<tc>, window_params = [{transform_indices = @transform_0, window_bounds = array<i64: 16, 512>}, {pipeline_mode = #tpu.pipeline_mode<synchronous>, transform_indices = @transform_1, window_bounds = array<i64: 72, 16>}, {pipeline_mode = #tpu.pipeline_mode<synchronous>, transform_indices = @transform_2, window_bounds = array<i64: 16, 24>}, {pipeline_mode = #tpu.pipeline_mode<synchronous>, transform_indices = @transform_3, window_bounds = array<i64: 64, 16>}, {pipeline_mode = #tpu.pipeline_mode<synchronous>, transform_indices = @transform_4, window_bounds = array<i64: 88, 1>}, {pipeline_mode = #tpu.pipeline_mode<synchronous>, transform_indices = @transform_5, window_bounds = array<i64: 3, 512>}, {transform_indices = @transform_6, window_bounds = array<i64: 64, 512>}]} {
    %c0 = arith.constant 0 : index
    %c0_0 = arith.constant 0 : index
    %0 = vector.load %arg1[%c0, %c0_0] : memref<16x512xf32, #tpu.memory_space<vmem>>, vector<16x512xf32>
    %c0_1 = arith.constant 0 : index
    %c0_2 = arith.constant 0 : index
    %1 = vector.load %arg5[%c0_1, %c0_2] : memref<88x1xf32, #tpu.memory_space<vmem>>, vector<8x1xf32>
    %c8 = arith.constant 8 : index
    %c0_3 = arith.constant 0 : index
    %2 = vector.load %arg5[%c8, %c0_3] : memref<88x1xf32, #tpu.memory_space<vmem>>, vector<16x1xf32>
    %c24 = arith.constant 24 : index
    %c0_4 = arith.constant 0 : index
    %3 = vector.load %arg5[%c24, %c0_4] : memref<88x1xf32, #tpu.memory_space<vmem>>, vector<64x1xf32>
    %c0_5 = arith.constant 0 : index
    %c0_6 = arith.constant 0 : index
    %4 = vector.load %arg2[%c0_5, %c0_6] : memref<72x16xf32, #tpu.memory_space<vmem>>, vector<72x16xf32>
    %cst = arith.constant dense<0.000000e+00> : vector<72x512xf32>
    %5 = tpu.matmul %4, %0, %cst {dimension_numbers = #tpu.dot_dimension_numbers<[1], [0], [0], [1], [0, 0, 1, 1], [], []>} : vector<72x16xf32>, vector<16x512xf32>, vector<72x512xf32> -> vector<72x512xf32>
    %6 = vector.extract_strided_slice %5 {offsets = [0, 0], sizes = [8, 512], strides = [1, 1]} : vector<72x512xf32> to vector<8x512xf32>
    %7 = vector.broadcast %1 : vector<8x1xf32> to vector<8x512xf32>
    %8 = arith.addf %6, %7 : vector<8x512xf32>
    %cst_7 = arith.constant 0.000000e+00 : f32
    %cst_8 = arith.constant 6.000000e+00 : f32
    %9 = vector.broadcast %cst_7 : f32 to vector<8x512xf32>
    %10 = arith.maximumf %9, %8 : vector<8x512xf32>
    %11 = vector.broadcast %cst_8 : f32 to vector<8x512xf32>
    %12 = arith.minimumf %11, %10 : vector<8x512xf32>
    %13 = vector.extract_strided_slice %5 {offsets = [8, 0], sizes = [64, 512], strides = [1, 1]} : vector<72x512xf32> to vector<64x512xf32>
    %c0_9 = arith.constant 0 : index
    %c0_10 = arith.constant 0 : index
    %14 = vector.load %arg6[%c0_9, %c0_10] : memref<3x512xf32, #tpu.memory_space<vmem>>, vector<3x512xf32>
    %c1_i32 = arith.constant 1 : i32
    %15 = tpu.dynamic_rotate %12 by %c1_i32 dim 1 : vector<8x512xf32>, i32 -> vector<8x512xf32>
    %16 = vector.extract_strided_slice %14 {offsets = [0, 0], sizes = [1, 512], strides = [1, 1]} : vector<3x512xf32> to vector<1x512xf32>
    %17 = vector.broadcast %16 : vector<1x512xf32> to vector<8x512xf32>
    %18 = arith.mulf %15, %17 : vector<8x512xf32>
    %c511_i32 = arith.constant 511 : i32
    %19 = tpu.dynamic_rotate %12 by %c511_i32 dim 1 : vector<8x512xf32>, i32 -> vector<8x512xf32>
    %20 = vector.extract_strided_slice %14 {offsets = [2, 0], sizes = [1, 512], strides = [1, 1]} : vector<3x512xf32> to vector<1x512xf32>
    %21 = vector.broadcast %20 : vector<1x512xf32> to vector<8x512xf32>
    %22 = arith.mulf %19, %21 : vector<8x512xf32>
    %23 = tpu.concatenate %18, %12, %22 in 0 : vector<8x512xf32>, vector<8x512xf32>, vector<8x512xf32> -> vector<24x512xf32>
    %c0_11 = arith.constant 0 : index
    %c0_12 = arith.constant 0 : index
    %24 = vector.load %arg3[%c0_11, %c0_12] : memref<16x24xf32, #tpu.memory_space<vmem>>, vector<16x24xf32>
    %cst_13 = arith.constant dense<0.000000e+00> : vector<16x512xf32>
    %25 = tpu.matmul %24, %23, %cst_13 {dimension_numbers = #tpu.dot_dimension_numbers<[1], [0], [0], [1], [0, 0, 1, 1], [], []>} : vector<16x24xf32>, vector<24x512xf32>, vector<16x512xf32> -> vector<16x512xf32>
    %26 = vector.broadcast %2 : vector<16x1xf32> to vector<16x512xf32>
    %27 = arith.addf %25, %26 : vector<16x512xf32>
    %cst_14 = arith.constant 0.000000e+00 : f32
    %cst_15 = arith.constant 6.000000e+00 : f32
    %28 = vector.broadcast %cst_14 : f32 to vector<16x512xf32>
    %29 = arith.maximumf %28, %27 : vector<16x512xf32>
    %30 = vector.broadcast %cst_15 : f32 to vector<16x512xf32>
    %31 = arith.minimumf %30, %29 : vector<16x512xf32>
    %c0_16 = arith.constant 0 : index
    %c0_17 = arith.constant 0 : index
    %32 = vector.load %arg4[%c0_16, %c0_17] : memref<64x16xf32, #tpu.memory_space<vmem>>, vector<64x16xf32>
    %cst_18 = arith.constant dense<0.000000e+00> : vector<64x512xf32>
    %33 = tpu.matmul %32, %31, %cst_18 {dimension_numbers = #tpu.dot_dimension_numbers<[1], [0], [0], [1], [0, 0, 1, 1], [], []>} : vector<64x16xf32>, vector<16x512xf32>, vector<64x512xf32> -> vector<64x512xf32>
    %34 = arith.addf %33, %13 : vector<64x512xf32>
    %35 = vector.broadcast %3 : vector<64x1xf32> to vector<64x512xf32>
    %36 = arith.addf %34, %35 : vector<64x512xf32>
    %cst_19 = arith.constant 0.000000e+00 : f32
    %cst_20 = arith.constant 6.000000e+00 : f32
    %37 = vector.broadcast %cst_19 : f32 to vector<64x512xf32>
    %38 = arith.maximumf %37, %36 : vector<64x512xf32>
    %39 = vector.broadcast %cst_20 : f32 to vector<64x512xf32>
    %40 = arith.minimumf %39, %38 : vector<64x512xf32>
    %c0_21 = arith.constant 0 : index
    %c0_22 = arith.constant 0 : index
    %41 = vector.load %arg7[%c0_21, %c0_22] : memref<64x512xf32, #tpu.memory_space<vmem>>, vector<64x512xf32>
    tpu.vector_store %arg7[%c0_21, %c0_22], %40 {strides = array<i32>} : memref<64x512xf32, #tpu.memory_space<vmem>>, vector<64x512xf32>,
    return
  }
  func.func @transform_0(%arg0: i32) -> (i32, i32) {
    %c0_i32 = arith.constant 0 : i32
    %c0_i32_0 = arith.constant 0 : i32
    return %c0_i32, %arg0 : i32, i32
  }
  func.func @transform_1(%arg0: i32) -> (i32, i32) {
    %c0_i32 = arith.constant 0 : i32
    %c0_i32_0 = arith.constant 0 : i32
    %c0_i32_1 = arith.constant 0 : i32
    return %c0_i32, %c0_i32_0 : i32, i32
  }
  func.func @transform_2(%arg0: i32) -> (i32, i32) {
    %c0_i32 = arith.constant 0 : i32
    %c0_i32_0 = arith.constant 0 : i32
    %c0_i32_1 = arith.constant 0 : i32
    return %c0_i32, %c0_i32_0 : i32, i32
  }
  func.func @transform_3(%arg0: i32) -> (i32, i32) {
    %c0_i32 = arith.constant 0 : i32
    %c0_i32_0 = arith.constant 0 : i32
    %c0_i32_1 = arith.constant 0 : i32
    return %c0_i32, %c0_i32_0 : i32, i32
  }
  func.func @transform_4(%arg0: i32) -> (i32, i32) {
    %c0_i32 = arith.constant 0 : i32
    %c0_i32_0 = arith.constant 0 : i32
    %c0_i32_1 = arith.constant 0 : i32
    return %c0_i32, %c0_i32_0 : i32, i32
  }
  func.func @transform_5(%arg0: i32) -> (i32, i32) {
    %c0_i32 = arith.constant 0 : i32
    %c0_i32_0 = arith.constant 0 : i32
    %c0_i32_1 = arith.constant 0 : i32
    return %c0_i32, %c0_i32_0 : i32, i32
  }
  func.func @transform_6(%arg0: i32) -> (i32, i32) {
    %c0_i32 = arith.constant 0 : i32
    %c0_i32_0 = arith.constant 0 : i32
    return %c0_i32, %arg0 : i32, i32
  }
}

</mosaic_0001>

<llo_original>
// kernel: tpu_custom_call.1
$region0: #{tpu_custom_call.1}
  #allocation0 [shape = 'u32[]', space=smem, size = 0x4, offset = 0x4, fixed_abs, tag = 'smem constant byte address 0x4 - core index']
  #allocation1 [shape = 'u32[144,128]{1,0:T(1,128)}', space=vmem, size = 0x12000, scoped, tag = 'internal scratch']
  %s0 = inlined_call_operand.vmem [shape: f32[16,1024], index: 0, kind: input, shape index: {}]
  %s1 = inlined_call_operand.vmem [shape: f32[72,16], index: 1, kind: input, shape index: {}]
  %s2 = inlined_call_operand.vmem [shape: f32[16,24], index: 2, kind: input, shape index: {}]
  %s3 = inlined_call_operand.vmem [shape: f32[64,16], index: 3, kind: input, shape index: {}]
  %s4 = inlined_call_operand.vmem [shape: f32[88,1], index: 4, kind: input, shape index: {}]
  %s5 = inlined_call_operand.vmem [shape: f32[3,512], index: 5, kind: input, shape index: {}]
  %s6 = inlined_call_operand.hbm [shape: f32[64,1024], index: 6, kind: output, shape index: {}]
  %s7 = sld [smem:[#allocation0]]
  $region80: #{tpu_custom_call.1} parent=0
    _
  %s9 = ssub.s32 1, %s7
  %s10 = scalar_select 0, %s9, %s7
  $region1: #{tpu_custom_call.1} parent=0
    #allocation2 [shape = 'u8[65536]{0}', space=vmem, size = 0x10000, scoped, tag = 'input window, operand 0']
    #allocation3 [shape = 'u8[262144]{0}', space=vmem, size = 0x40000, scoped, tag = 'output window, operand 0']
    #allocation4 [shape = 's32[2]{0}', space=sflag, size = 0x8, scoped, tag = 'scoped memory for tpu_custom_call.1']
    %11 = vsyncpa [#allocation4], 0
    %s12 = scalar_lea.sflag [#allocation4], 1
    %13 = vsyncpa %s12, 0
    loop: start=0, step=1, limit=4
    $region2: #{tpu_custom_call.1} parent=1 // loop_pre_header
      _
    $region3: #{tpu_custom_call.1} parent=1 // loop_header
      %s15 = sphi 0, %s19
      %p16 = scmp.ge.s32.totalorder %s15, 4
      %s25 = sphi 0, %s27
      %s28 = sphi 0, %s25
      %s29 = sphi 0, %s28
      %s45 = sphi 0, %s29
      %s49 = sphi 0, %s49
      %s51 = sphi 0, %s49
      %s52 = sphi 0, %s51
      %s66 = sphi 0, %s52
      %s70 = sphi 0, %s70
      %s72 = sphi 0, %s70
      %s73 = sphi 0, %s72
      %s87 = sphi 0, %s73
      %s91 = sphi 0, %s91
      %s93 = sphi 0, %s91
      %s94 = sphi 0, %s93
      %s108 = sphi 0, %s94
      %s112 = sphi 0, %s112
      %s114 = sphi 0, %s112
      %s115 = sphi 0, %s114
      %s129 = sphi 0, %s115
      %s133 = sphi 0, %s133
      %s135 = sphi 0, %s133
      %s136 = sphi 0, %s135
      %s150 = sphi 0, %s136
      %s156 = sphi 0, %s158
      %s159 = sphi 0, %s156
      %s160 = sphi 0, %s159
      %s176 = sphi 0, %s160
    $region4: #{tpu_custom_call.1} parent=1 // loop_header_branch
      %18 = sbr.rel (%p16) target = $region8
    $region5: #{tpu_custom_call.1} parent=1 // loop_body
      %s20 = ssub.s32 %s15, 1
      %s21 = ssub.s32 %s15, 2
      %s22 = sadd.s32 %s15, 1
      %s23 = ssub.s32 %s15, %s22
      %p24 = scmp.eq.s32.totalorder %s23, 0
      %s26 = sadd.s32 %s25, 1
      %s27 = scalar_select %p24, %s25, %s26
      %p30 = pneg %p24
      %p31 = scmp.eq.s32.totalorder %s15, 1
      %p32 = por %p30, %p31
      %p33 = scmp.ne.s32.totalorder %s25, %s28
      %p34 = scmp.eq.s32.totalorder %s15, 0
      %p35 = por %p33, %p34
      %p36 = scmp.ne.s32.totalorder %s25, %s28
      %p37 = scmp.eq.s32.totalorder %s20, 1
      %p38 = por %p36, %p37
      %p39 = scmp.ne.s32.totalorder %s28, %s29
      %p40 = scmp.eq.s32.totalorder %s20, 0
      %p41 = por %p39, %p40
      %p42 = scmp.ne.s32.totalorder %s28, %s29
      %p43 = scmp.eq.s32.totalorder %s21, 1
      %p44 = por %p42, %p43
      %p46 = scmp.ne.s32.totalorder %s29, %s45
      %p47 = scmp.eq.s32.totalorder %s21, 0
      %p48 = por %p46, %p47
      %s50 = sadd.s32 %s49, 1
      %p53 = scmp.eq.s32.totalorder %s15, 1
      %p54 = scmp.ne.s32.totalorder %s49, %s51
      %p55 = scmp.eq.s32.totalorder %s15, 0
      %p56 = por %p54, %p55
      %p57 = scmp.ne.s32.totalorder %s49, %s51
      %p58 = scmp.eq.s32.totalorder %s20, 1
      %p59 = por %p57, %p58
      %p60 = scmp.ne.s32.totalorder %s51, %s52
      %p61 = scmp.eq.s32.totalorder %s20, 0
      %p62 = por %p60, %p61
      %p63 = scmp.ne.s32.totalorder %s51, %s52
      %p64 = scmp.eq.s32.totalorder %s21, 1
      %p65 = por %p63, %p64
      %p67 = scmp.ne.s32.totalorder %s52, %s66
      %p68 = scmp.eq.s32.totalorder %s21, 0
      %p69 = por %p67, %p68
      %s71 = sadd.s32 %s70, 1
      %p74 = scmp.eq.s32.totalorder %s15, 1
      %p75 = scmp.ne.s32.totalorder %s70, %s72
      %p76 = scmp.eq.s32.totalorder %s15, 0
      %p77 = por %p75, %p76
      %p78 = scmp.ne.s32.totalorder %s70, %s72
      %p79 = scmp.eq.s32.totalorder %s20, 1
      %p80 = por %p78, %p79
      %p81 = scmp.ne.s32.totalorder %s72, %s73
      %p82 = scmp.eq.s32.totalorder %s20, 0
      %p83 = por %p81, %p82
      %p84 = scmp.ne.s32.totalorder %s72, %s73
      %p85 = scmp.eq.s32.totalorder %s21, 1
      %p86 = por %p84, %p85
      %p88 = scmp.ne.s32.totalorder %s73, %s87
      %p89 = scmp.eq.s32.totalorder %s21, 0
      %p90 = por %p88, %p89
      %s92 = sadd.s32 %s91, 1
      %p95 = scmp.eq.s32.totalorder %s15, 1
      %p96 = scmp.ne.s32.totalorder %s91, %s93
      %p97 = scmp.eq.s32.totalorder %s15, 0
      %p98 = por %p96, %p97
      %p99 = scmp.ne.s32.totalorder %s91, %s93
      %p100 = scmp.eq.s32.totalorder %s20, 1
      %p101 = por %p99, %p100
      %p102 = scmp.ne.s32.totalorder %s93, %s94
      %p103 = scmp.eq.s32.totalorder %s20, 0
      %p104 = por %p102, %p103
      %p105 = scmp.ne.s32.totalorder %s93, %s94
      %p106 = scmp.eq.s32.totalorder %s21, 1
      %p107 = por %p105, %p106
      %p109 = scmp.ne.s32.totalorder %s94, %s108
      %p110 = scmp.eq.s32.totalorder %s21, 0
      %p111 = por %p109, %p110
      %s113 = sadd.s32 %s112, 1
      %p116 = scmp.eq.s32.totalorder %s15, 1
      %p117 = scmp.ne.s32.totalorder %s112, %s114
      %p118 = scmp.eq.s32.totalorder %s15, 0
      %p119 = por %p117, %p118
      %p120 = scmp.ne.s32.totalorder %s112, %s114
      %p121 = scmp.eq.s32.totalorder %s20, 1
      %p122 = por %p120, %p121
      %p123 = scmp.ne.s32.totalorder %s114, %s115
      %p124 = scmp.eq.s32.totalorder %s20, 0
      %p125 = por %p123, %p124
      %p126 = scmp.ne.s32.totalorder %s114, %s115
      %p127 = scmp.eq.s32.totalorder %s21, 1
      %p128 = por %p126, %p127
      %p130 = scmp.ne.s32.totalorder %s115, %s129
      %p131 = scmp.eq.s32.totalorder %s21, 0
      %p132 = por %p130, %p131
      %s134 = sadd.s32 %s133, 1
      %p137 = scmp.eq.s32.totalorder %s15, 1
      %p138 = scmp.ne.s32.totalorder %s133, %s135
      %p139 = scmp.eq.s32.totalorder %s15, 0
      %p140 = por %p138, %p139
      %p141 = scmp.ne.s32.totalorder %s133, %s135
      %p142 = scmp.eq.s32.totalorder %s20, 1
      %p143 = por %p141, %p142
      %p144 = scmp.ne.s32.totalorder %s135, %s136
      %p145 = scmp.eq.s32.totalorder %s20, 0
      %p146 = por %p144, %p145
      %p147 = scmp.ne.s32.totalorder %s135, %s136
      %p148 = scmp.eq.s32.totalorder %s21, 1
      %p149 = por %p147, %p148
      %p151 = scmp.ne.s32.totalorder %s136, %s150
      %p152 = scmp.eq.s32.totalorder %s21, 0
      %p153 = por %p151, %p152
      %s154 = ssub.s32 %s15, %s22
      %p155 = scmp.eq.s32.totalorder %s154, 0
      %s157 = sadd.s32 %s156, 1
      %s158 = scalar_select %p155, %s156, %s157
      %p161 = pneg %p155
      %p162 = scmp.eq.s32.totalorder %s15, 1
      %p163 = por %p161, %p162
      %p164 = scmp.ne.s32.totalorder %s156, %s159
      %p165 = scmp.eq.s32.totalorder %s15, 0
      %p166 = por %p164, %p165
      %p167 = scmp.ne.s32.totalorder %s156, %s159
      %p168 = scmp.eq.s32.totalorder %s20, 1
      %p169 = por %p167, %p168
      %p170 = scmp.ne.s32.totalorder %s159, %s160
      %p171 = scmp.eq.s32.totalorder %s20, 0
      %p172 = por %p170, %p171
      %p173 = scmp.ne.s32.totalorder %s159, %s160
      %p174 = scmp.eq.s32.totalorder %s21, 1
      %p175 = por %p173, %p174
      %p177 = scmp.ne.s32.totalorder %s160, %s176
      %p178 = scmp.eq.s32.totalorder %s21, 0
      %p179 = por %p177, %p178
      %p180 = scmp.le.s32.totalorder 1, %s15
      %p181 = scmp.lt.s32.totalorder %s15, 3
      %p182 = pnand %p180, %p181
      %p183 = pneg %p182
      // Predicated region
      $region9: #{tpu_custom_call.1} parent=5 // pred_check
        _
      $region10: #{tpu_custom_call.1} parent=5 // pred_check_branch
        %185 = sbr.rel (%p182) target = $region12
      $region11: #{tpu_custom_call.1} parent=5 // pred_region
        %s186 = ssub.s32 %s15, 1
        // Predicated region
        $region13: #{tpu_custom_call.1} parent=11 // pred_check
          %p187 = pneg %p62
        $region14: #{tpu_custom_call.1} parent=11 // pred_check_branch
          %189 = sbr.rel (%p187) target = $region16
        $region15: #{tpu_custom_call.1} parent=11 // pred_region
          _
        $region16: #{tpu_custom_call.1} parent=11 // pred_fallthru
          _
        // Predicated region
        $region17: #{tpu_custom_call.1} parent=11 // pred_check
          %p190 = pneg %p83
        $region18: #{tpu_custom_call.1} parent=11 // pred_check_branch
          %192 = sbr.rel (%p190) target = $region20
        $region19: #{tpu_custom_call.1} parent=11 // pred_region
          _
        $region20: #{tpu_custom_call.1} parent=11 // pred_fallthru
          _
        // Predicated region
        $region21: #{tpu_custom_call.1} parent=11 // pred_check
          %p193 = pneg %p104
        $region22: #{tpu_custom_call.1} parent=11 // pred_check_branch
          %195 = sbr.rel (%p193) target = $region24
        $region23: #{tpu_custom_call.1} parent=11 // pred_region
          _
        $region24: #{tpu_custom_call.1} parent=11 // pred_fallthru
          _
        // Predicated region
        $region25: #{tpu_custom_call.1} parent=11 // pred_check
          %p196 = pneg %p125
        $region26: #{tpu_custom_call.1} parent=11 // pred_check_branch
          %198 = sbr.rel (%p196) target = $region28
        $region27: #{tpu_custom_call.1} parent=11 // pred_region
          _
        $region28: #{tpu_custom_call.1} parent=11 // pred_fallthru
          _
        // Predicated region
        $region29: #{tpu_custom_call.1} parent=11 // pred_check
          %p199 = pneg %p146
        $region30: #{tpu_custom_call.1} parent=11 // pred_check_branch
          %201 = sbr.rel (%p199) target = $region32
        $region31: #{tpu_custom_call.1} parent=11 // pred_region
          _
        $region32: #{tpu_custom_call.1} parent=11 // pred_fallthru
          _
      $region12: #{tpu_custom_call.1} parent=5 // pred_fallthru
        _
      %p202 = scmp.lt.s32.totalorder %s15, 2
      // Predicated region
      $region33: #{tpu_custom_call.1} parent=5 // pred_check
        %p203 = pneg %p202
      $region34: #{tpu_custom_call.1} parent=5 // pred_check_branch
        %205 = sbr.rel (%p203) target = $region36
      $region35: #{tpu_custom_call.1} parent=5 // pred_region
        // Predicated region
        $region37: #{tpu_custom_call.1} parent=35 // pred_check
          %p206 = pneg %p35
        $region38: #{tpu_custom_call.1} parent=35 // pred_check_branch
          %208 = sbr.rel (%p206) target = $region40
        $region39: #{tpu_custom_call.1} parent=35 // pred_region
          %s209 = sand.u32 %s25, 1
          %s210 = sand.u32 %s25, 1
          %s211 = smul.addr %s210, 64
          %s212 = scalar_lea.vmem [#allocation2], %s211
          %s213 = smul.u32 4, %s15
          %s214 = smul.addr %s213, 8
          %s215 = scalar_lea.vmem %s0, %s214
          // Predicated region
          $region41: #{tpu_custom_call.1} parent=39 // pred_check
            _
          $region42: #{tpu_custom_call.1} parent=39 // pred_check_branch
            %217 = sbr.rel (0) target = $region44
          $region43: #{tpu_custom_call.1} parent=39 // pred_region
            // Predicated region
            $region45: #{tpu_custom_call.1} parent=43 // pred_check
              _
            $region46: #{tpu_custom_call.1} parent=43 // pred_check_branch
              %219 = sbr.rel (0) target = $region48
            $region47: #{tpu_custom_call.1} parent=43 // pred_region
              loop: start=0, step=1, limit=1
              $region49: #{tpu_custom_call.1} parent=47 // loop_pre_header
                _
              $region50: #{tpu_custom_call.1} parent=47 // loop_header
                %s221 = sphi 0, %s225
                %p222 = scmp.ge.s32.totalorder %s221, 1
                %s226 = sphi %s215, %s215
                %s227 = sphi %s212, %s212
              $region51: #{tpu_custom_call.1} parent=47 // loop_header_branch
                %224 = sbr.rel (%p222) target = $region55
              $region52: #{tpu_custom_call.1} parent=47 // loop_body
                %v228 = vld [vmem:[%s226] sm:$0xff]
                %229 = vst [vmem:[%s227] sm:$0xff] %v228
                %v230 = vld [vmem:[%s226 + $0x8] sm:$0xff]
                %231 = vst [vmem:[%s227 + $0x8] sm:$0xff] %v230
                %v232 = vld [vmem:[%s226 + $0x10] sm:$0xff]
                %233 = vst [vmem:[%s227 + $0x10] sm:$0xff] %v232
                %v234 = vld [vmem:[%s226 + $0x18] sm:$0xff]
                %235 = vst [vmem:[%s227 + $0x18] sm:$0xff] %v234
                %v236 = vld [vmem:[%s226 + $0x40] sm:$0xff]
                %237 = vst [vmem:[%s227 + $0x20] sm:$0xff] %v236
                %v238 = vld [vmem:[%s226 + $0x48] sm:$0xff]
                %239 = vst [vmem:[%s227 + $0x28] sm:$0xff] %v238
                %v240 = vld [vmem:[%s226 + $0x50] sm:$0xff]
                %241 = vst [vmem:[%s227 + $0x30] sm:$0xff] %v240
                %v242 = vld [vmem:[%s226 + $0x58] sm:$0xff]
                %243 = vst [vmem:[%s227 + $0x38] sm:$0xff] %v242
              $region53: #{tpu_custom_call.1} parent=47 // loop_footer
                %s225 = sadd.s32 1, %s221
              $region54: #{tpu_custom_call.1} parent=47 // loop_footer_branch
                %220 = sbr.rel target = $region50
              $region55: #{tpu_custom_call.1} parent=47 // loop_exit
                _
            $region48: #{tpu_custom_call.1} parent=43 // pred_fallthru
              _
            // Predicated region
            $region56: #{tpu_custom_call.1} parent=43 // pred_check
              _
            $region57: #{tpu_custom_call.1} parent=43 // pred_check_branch
              %245 = sbr.rel target = $region59
            $region58: #{tpu_custom_call.1} parent=43 // pred_region
              _
            $region59: #{tpu_custom_call.1} parent=43 // pred_fallthru
              _
          $region44: #{tpu_custom_call.1} parent=39 // pred_fallthru
            _
          %246 = vnop
        $region40: #{tpu_custom_call.1} parent=35 // pred_fallthru
          _
      $region36: #{tpu_custom_call.1} parent=5 // pred_fallthru
        _
      %p247 = scmp.le.s32.totalorder 1, %s15
      %p248 = scmp.lt.s32.totalorder %s15, 3
      %p249 = pnand %p247, %p248
      %p250 = pneg %p249
      // Predicated region
      $region60: #{tpu_custom_call.1} parent=5 // pred_check
        _
      $region61: #{tpu_custom_call.1} parent=5 // pred_check_branch
        %252 = sbr.rel (%p249) target = $region63
      $region62: #{tpu_custom_call.1} parent=5 // pred_region
        %s253 = ssub.s32 %s15, 1
        %s254 = sand.u32 %s28, 1
        %s255 = sand.u32 %s28, 1
        %s256 = smul.addr %s255, 64
        %s257 = scalar_lea.vmem [#allocation2], %s256
        // Predicated region
        $region64: #{tpu_custom_call.1} parent=62 // pred_check
          %p258 = pneg %p41
        $region65: #{tpu_custom_call.1} parent=62 // pred_check_branch
          %260 = sbr.rel (%p258) target = $region67
        $region66: #{tpu_custom_call.1} parent=62 // pred_region
          _
        $region67: #{tpu_custom_call.1} parent=62 // pred_fallthru
          _
        %s261 = sand.u32 %s28, 1
        %s262 = sand.u32 %s28, 1
        %s263 = smul.addr %s262, 64
        %s264 = scalar_lea.vmem [#allocation2], %s263
        %p265 = pneg %p41
        %p266 = pneg %p38
        %p267 = pneg %p62
        %p268 = pneg %p59
        %p269 = pneg %p83
        %p270 = pneg %p80
        %p271 = pneg %p104
        %p272 = pneg %p101
        %p273 = pneg %p125
        %p274 = pneg %p122
        %p275 = pneg %p146
        %p276 = pneg %p143
        %p277 = pneg %p172
        %p278 = pneg %p169
        %s279 = sand.u32 %s159, 1
        %s280 = scalar_lea.sflag [#allocation4], %s279
        %s281 = sand.u32 %s159, 1
        %s282 = smul.addr %s281, 256
        %s283 = scalar_lea.vmem [#allocation3], %s282
        %s284 = smul.u32 4, %s20
        %s285 = smul.u32 4, %s20
        %v286 = vld [vmem:[%s257] sm:$0xff]
        %v287 = vld [vmem:[%s257 + $0x8] sm:$0xff]
        %v288 = vld [vmem:[%s257 + $0x10] sm:$0xff]
        %v289 = vld [vmem:[%s257 + $0x18] sm:$0xff]
        %v290 = vld [vmem:[%s257 + $0x20] sm:$0xff]
        %v291 = vld [vmem:[%s257 + $0x28] sm:$0xff]
        %v292 = vld [vmem:[%s257 + $0x30] sm:$0xff]
        %v293 = vld [vmem:[%s257 + $0x38] sm:$0xff]
        %v294 = vld [vmem:[%s4] sm:$0xff]
        %v295 = vld [vmem:[%s4 + $0x8] sm:$0xff]
        %v296 = vld [vmem:[%s4 + $0x10] sm:$0xff]
        %v297 = vld [vmem:[%s4 + $0x18] sm:$0xff]
        %v298 = vld [vmem:[%s4 + $0x20] sm:$0xff]
        %v299 = vld [vmem:[%s4 + $0x28] sm:$0xff]
        %v300 = vld [vmem:[%s4 + $0x30] sm:$0xff]
        %v301 = vld [vmem:[%s4 + $0x38] sm:$0xff]
        %v302 = vld [vmem:[%s4 + $0x40] sm:$0xff]
        %v303 = vld [vmem:[%s4 + $0x48] sm:$0xff]
        %v304 = vld [vmem:[%s4 + $0x50] sm:$0xff]
        %v305 = vld [vmem:[%s1] sm:$0xff]
        %v306 = vld [vmem:[%s1 + $0x8] sm:$0xff]
        %v307 = vld [vmem:[%s1 + $0x10] sm:$0xff]
        %v308 = vld [vmem:[%s1 + $0x18] sm:$0xff]
        %v309 = vld [vmem:[%s1 + $0x20] sm:$0xff]
        %v310 = vld [vmem:[%s1 + $0x28] sm:$0xff]
        %v311 = vld [vmem:[%s1 + $0x30] sm:$0xff]
        %v312 = vld [vmem:[%s1 + $0x38] sm:$0xff]
        %v313 = vld [vmem:[%s1 + $0x40] sm:$0xff]
        %vm314 = vcmask 130048
        %v316 = vsel %vm314, %v305, 0
        %v319 = vsel %vm314, %v306, 0
        %v322 = vsel %vm314, %v307, 0
        %v325 = vsel %vm314, %v308, 0
        %v328 = vsel %vm314, %v309, 0
        %v331 = vsel %vm314, %v310, 0
        %v334 = vsel %vm314, %v311, 0
        %v337 = vsel %vm314, %v312, 0
        %v340 = vsel %vm314, %v313, 0
        %342 = vmatprep.subr.mxu0 0.0
        %343 = vmatpush1.msra.mxu0 0.0
        %344 = vmatprep.subr.mxu0 0.0
        %345 = vmatpush1.msra.mxu0 0.0
        %346 = vmatprep.subr.mxu0 0.0
        %347 = vmatpush1.msra.mxu0 0.0
        %348 = vmatprep.subr.mxu0 0.0
        %349 = vmatpush1.msra.mxu0 0.0
        %350 = vmatprep.subr.mxu0 0.0
        %351 = vmatpush1.msra.mxu0 0.0
        %352 = vmatprep.subr.mxu0 0.0
        %353 = vmatpush1.msra.mxu0 0.0
        %354 = vmatprep.subr.mxu0 0.0
        %355 = vmatpush1.msra.mxu0 0.0
        %356 = vmatprep.subr.mxu0 0.0
        %357 = vmatpush1.msra.mxu0 0.0
        %358 = vmatprep.subr.mxu0 0.0
        %359 = vmatpush1.msra.mxu0 0.0
        %360 = vmatprep.subr.mxu0 0.0
        %361 = vmatpush1.msra.mxu0 0.0
        %362 = vmatprep.subr.mxu0 0.0
        %363 = vmatpush1.msra.mxu0 0.0
        %364 = vmatprep.subr.mxu0 0.0
        %365 = vmatpush1.msra.mxu0 0.0
        %366 = vmatprep.subr.mxu0 0.0
        %367 = vmatpush1.msra.mxu0 0.0
        %368 = vmatprep.subr.mxu0 0.0
        %369 = vmatpush1.msra.mxu0 0.0
        %370 = vmatprep.subr.mxu0 %v291
        %371 = vmatpush1.msra.mxu0 %v290
        %372 = vmatprep.subr.mxu0 %v287
        %373 = vmatpush1.msra.mxu0 %v286
        %374 = vmatprep.subr.mxu0 0.0
        %375 = vmatpush2.msra.mxu0 0.0
        %376 = vmatprep.subr.mxu0 0.0
        %377 = vmatpush2.msra.mxu0 0.0
        %378 = vmatprep.subr.mxu0 0.0
        %379 = vmatpush2.msra.mxu0 0.0
        %380 = vmatprep.subr.mxu0 0.0
        %381 = vmatpush2.msra.mxu0 0.0
        %382 = vmatprep.subr.mxu0 0.0
        %383 = vmatpush2.msra.mxu0 0.0
        %384 = vmatprep.subr.mxu0 0.0
        %385 = vmatpush2.msra.mxu0 0.0
        %386 = vmatprep.subr.mxu0 0.0
        %387 = vmatpush2.msra.mxu0 0.0
        %388 = vmatprep.subr.mxu0 0.0
        %389 = vmatpush2.msra.mxu0 0.0
        %390 = vmatprep.subr.mxu0 0.0
        %391 = vmatpush2.msra.mxu0 0.0
        %392 = vmatprep.subr.mxu0 0.0
        %393 = vmatpush2.msra.mxu0 0.0
        %394 = vmatprep.subr.mxu0 0.0
        %395 = vmatpush2.msra.mxu0 0.0
        %396 = vmatprep.subr.mxu0 0.0
        %397 = vmatpush2.msra.mxu0 0.0
        %398 = vmatprep.subr.mxu0 0.0
        %399 = vmatpush2.msra.mxu0 0.0
        %400 = vmatprep.subr.mxu0 0.0
        %401 = vmatpush2.msra.mxu0 0.0
        %402 = vmatprep.subr.mxu0 0.0
        %403 = vmatpush2.msra.mxu0 0.0
        %404 = vmatprep.subr.mxu0 0.0
        %405 = vmatpush2.msra.mxu0 0.0
        %406 = vmatprep.mubr.f32.mxu0 0.0
        %407 = vmatmul.mubr.f32.gmra.mxu0 %v316
        %v408 = vpop.f32.mrf.mxu0
        %v409 = vadd.f32 0.0, %v408
        %v410 = vpop.f32.mrf.mxu0
        %v411 = vadd.f32 0.0, %v410
        %412 = vmatprep.mubr.f32.mxu0 0.0
        %413 = vmatmul.mubr.f32.gmra.mxu0 %v319
        %v414 = vpop.f32.mrf.mxu0
        %v415 = vadd.f32 0.0, %v414
        %v416 = vpop.f32.mrf.mxu0
        %v417 = vadd.f32 0.0, %v416
        %418 = vmatprep.mubr.f32.mxu0 0.0
        %419 = vmatmul.mubr.f32.gmra.mxu0 %v322
        %v420 = vpop.f32.mrf.mxu0
        %v421 = vadd.f32 0.0, %v420
        %v422 = vpop.f32.mrf.mxu0
        %v423 = vadd.f32 0.0, %v422
        %424 = vmatprep.mubr.f32.mxu0 0.0
        %425 = vmatmul.mubr.f32.gmra.mxu0 %v325
        %v426 = vpop.f32.mrf.mxu0
        %v427 = vadd.f32 0.0, %v426
        %v428 = vpop.f32.mrf.mxu0
        %v429 = vadd.f32 0.0, %v428
        %430 = vmatprep.mubr.f32.mxu0 0.0
        %431 = vmatmul.mubr.f32.gmra.mxu0 %v328
        %v432 = vpop.f32.mrf.mxu0
        %v433 = vadd.f32 0.0, %v432
        %v434 = vpop.f32.mrf.mxu0
        %v435 = vadd.f32 0.0, %v434
        %436 = vmatprep.mubr.f32.mxu0 0.0
        %437 = vmatmul.mubr.f32.gmra.mxu0 %v331
        %v438 = vpop.f32.mrf.mxu0
        %v439 = vadd.f32 0.0, %v438
        %v440 = vpop.f32.mrf.mxu0
        %v441 = vadd.f32 0.0, %v440
        %442 = vmatprep.mubr.f32.mxu0 0.0
        %443 = vmatmul.mubr.f32.gmra.mxu0 %v334
        %v444 = vpop.f32.mrf.mxu0
        %v445 = vadd.f32 0.0, %v444
        %v446 = vpop.f32.mrf.mxu0
        %v447 = vadd.f32 0.0, %v446
        %448 = vmatprep.mubr.f32.mxu0 0.0
        %449 = vmatmul.mubr.f32.gmra.mxu0 %v337
        %v450 = vpop.f32.mrf.mxu0
        %v451 = vadd.f32 0.0, %v450
        %v452 = vpop.f32.mrf.mxu0
        %v453 = vadd.f32 0.0, %v452
        %454 = vmatprep.mubr.f32.mxu0 0.0
        %455 = vmatmul.mubr.f32.gmra.mxu0 %v340
        %v456 = vpop.f32.mrf.mxu0
        %v457 = vadd.f32 0.0, %v456
        %v458 = vpop.f32.mrf.mxu0
        %v459 = vadd.f32 0.0, %v458
        %460 = vdwg.mxu0
        %461 = vmatprep.subr.mxu0 0.0
        %462 = vmatpush1.msra.mxu0 0.0
        %463 = vmatprep.subr.mxu0 0.0
        %464 = vmatpush1.msra.mxu0 0.0
        %465 = vmatprep.subr.mxu0 0.0
        %466 = vmatpush1.msra.mxu0 0.0
        %467 = vmatprep.subr.mxu0 0.0
        %468 = vmatpush1.msra.mxu0 0.0
        %469 = vmatprep.subr.mxu0 0.0
        %470 = vmatpush1.msra.mxu0 0.0
        %471 = vmatprep.subr.mxu0 0.0
        %472 = vmatpush1.msra.mxu0 0.0
        %473 = vmatprep.subr.mxu0 0.0
        %474 = vmatpush1.msra.mxu0 0.0
        %475 = vmatprep.subr.mxu0 0.0
        %476 = vmatpush1.msra.mxu0 0.0
        %477 = vmatprep.subr.mxu0 0.0
        %478 = vmatpush1.msra.mxu0 0.0
        %479 = vmatprep.subr.mxu0 0.0
        %480 = vmatpush1.msra.mxu0 0.0
        %481 = vmatprep.subr.mxu0 0.0
        %482 = vmatpush1.msra.mxu0 0.0
        %483 = vmatprep.subr.mxu0 0.0
        %484 = vmatpush1.msra.mxu0 0.0
        %485 = vmatprep.subr.mxu0 0.0
        %486 = vmatpush1.msra.mxu0 0.0
        %487 = vmatprep.subr.mxu0 0.0
        %488 = vmatpush1.msra.mxu0 0.0
        %489 = vmatprep.subr.mxu0 %v293
        %490 = vmatpush1.msra.mxu0 %v292
        %491 = vmatprep.subr.mxu0 %v289
        %492 = vmatpush1.msra.mxu0 %v288
        %493 = vmatprep.subr.mxu0 0.0
        %494 = vmatpush2.msra.mxu0 0.0
        %495 = vmatprep.subr.mxu0 0.0
        %496 = vmatpush2.msra.mxu0 0.0
        %497 = vmatprep.subr.mxu0 0.0
        %498 = vmatpush2.msra.mxu0 0.0
        %499 = vmatprep.subr.mxu0 0.0
        %500 = vmatpush2.msra.mxu0 0.0
        %501 = vmatprep.subr.mxu0 0.0
        %502 = vmatpush2.msra.mxu0 0.0
        %503 = vmatprep.subr.mxu0 0.0
        %504 = vmatpush2.msra.mxu0 0.0
        %505 = vmatprep.subr.mxu0 0.0
        %506 = vmatpush2.msra.mxu0 0.0
        %507 = vmatprep.subr.mxu0 0.0
        %508 = vmatpush2.msra.mxu0 0.0
        %509 = vmatprep.subr.mxu0 0.0
        %510 = vmatpush2.msra.mxu0 0.0
        %511 = vmatprep.subr.mxu0 0.0
        %512 = vmatpush2.msra.mxu0 0.0
        %513 = vmatprep.subr.mxu0 0.0
        %514 = vmatpush2.msra.mxu0 0.0
        %515 = vmatprep.subr.mxu0 0.0
        %516 = vmatpush2.msra.mxu0 0.0
        %517 = vmatprep.subr.mxu0 0.0
        %518 = vmatpush2.msra.mxu0 0.0
        %519 = vmatprep.subr.mxu0 0.0
        %520 = vmatpush2.msra.mxu0 0.0
        %521 = vmatprep.subr.mxu0 0.0
        %522 = vmatpush2.msra.mxu0 0.0
        %523 = vmatprep.subr.mxu0 0.0
        %524 = vmatpush2.msra.mxu0 0.0
        %525 = vmatprep.mubr.f32.mxu0 0.0
        %526 = vmatmul.mubr.f32.gmra.mxu0 %v316
        %v527 = vpop.f32.mrf.mxu0
        %v528 = vadd.f32 0.0, %v527
        %v529 = vpop.f32.mrf.mxu0
        %v530 = vadd.f32 0.0, %v529
        %531 = vmatprep.mubr.f32.mxu0 0.0
        %532 = vmatmul.mubr.f32.gmra.mxu0 %v319
        %v533 = vpop.f32.mrf.mxu0
        %v534 = vadd.f32 0.0, %v533
        %v535 = vpop.f32.mrf.mxu0
        %v536 = vadd.f32 0.0, %v535
        %537 = vmatprep.mubr.f32.mxu0 0.0
        %538 = vmatmul.mubr.f32.gmra.mxu0 %v322
        %v539 = vpop.f32.mrf.mxu0
        %v540 = vadd.f32 0.0, %v539
        %v541 = vpop.f32.mrf.mxu0
        %v542 = vadd.f32 0.0, %v541
        %543 = vmatprep.mubr.f32.mxu0 0.0
        %544 = vmatmul.mubr.f32.gmra.mxu0 %v325
        %v545 = vpop.f32.mrf.mxu0
        %v546 = vadd.f32 0.0, %v545
        %v547 = vpop.f32.mrf.mxu0
        %v548 = vadd.f32 0.0, %v547
        %549 = vmatprep.mubr.f32.mxu0 0.0
        %550 = vmatmul.mubr.f32.gmra.mxu0 %v328
        %v551 = vpop.f32.mrf.mxu0
        %v552 = vadd.f32 0.0, %v551
        %v553 = vpop.f32.mrf.mxu0
        %v554 = vadd.f32 0.0, %v553
        %555 = vmatprep.mubr.f32.mxu0 0.0
        %556 = vmatmul.mubr.f32.gmra.mxu0 %v331
        %v557 = vpop.f32.mrf.mxu0
        %v558 = vadd.f32 0.0, %v557
        %v559 = vpop.f32.mrf.mxu0
        %v560 = vadd.f32 0.0, %v559
        %561 = vmatprep.mubr.f32.mxu0 0.0
        %562 = vmatmul.mubr.f32.gmra.mxu0 %v334
        %v563 = vpop.f32.mrf.mxu0
        %v564 = vadd.f32 0.0, %v563
        %v565 = vpop.f32.mrf.mxu0
        %v566 = vadd.f32 0.0, %v565
        %567 = vmatprep.mubr.f32.mxu0 0.0
        %568 = vmatmul.mubr.f32.gmra.mxu0 %v337
        %v569 = vpop.f32.mrf.mxu0
        %v570 = vadd.f32 0.0, %v569
        %v571 = vpop.f32.mrf.mxu0
        %v572 = vadd.f32 0.0, %v571
        %573 = vmatprep.mubr.f32.mxu0 0.0
        %574 = vmatmul.mubr.f32.gmra.mxu0 %v340
        %v575 = vpop.f32.mrf.mxu0
        %v576 = vadd.f32 0.0, %v575
        %v577 = vpop.f32.mrf.mxu0
        %v578 = vadd.f32 0.0, %v577
        %579 = vdwg.mxu0
        %581 = vset.pattern.permute.xlu0 0
        %582 = vperm.xlu0 %581, %v294
        %v583 = vpop.permute.xlu0 %582
        %v585 = vadd.f32 %v409, %v583
        %v586 = vadd.f32 %v411, %v583
        %v587 = vadd.f32 %v528, %v583
        %v588 = vadd.f32 %v530, %v583
        %v589 = vmax.f32 %v585, 0.0
        %v590 = vmax.f32 %v586, 0.0
        %v591 = vmax.f32 %v587, 0.0
        %v592 = vmax.f32 %v588, 0.0
        %v593 = vmin.f32 %v589, 6.0
        %v594 = vmin.f32 %v590, 6.0
        %v595 = vmin.f32 %v591, 6.0
        %v596 = vmin.f32 %v592, 6.0
        %v597 = vld [vmem:[%s5] sm:$0x77]
        %v598 = vld [vmem:[%s5 + $0x8] sm:$0x77]
        %599 = vrot.lane.b32.xlu0 %v593, 1
        %v600 = vpop.permute.xlu0 %599
        %601 = vrot.lane.b32.xlu0 %v594, 1
        %v602 = vpop.permute.xlu0 %601
        %603 = vrot.lane.b32.xlu0 %v595, 1
        %v604 = vpop.permute.xlu0 %603
        %605 = vrot.lane.b32.xlu0 %v596, 1
        %v606 = vpop.permute.xlu0 %605
        %v607 = vlaneseq
        %v608 = vand.u32 %v607, 127
        %vm609 = vcmp.lt.s32.totalorder %v608, 1
        %v610 = vsel %vm609, %v604, %v606
        %v611 = vsel %vm609, %v602, %v604
        %v612 = vsel %vm609, %v600, %v602
        %v613 = vsel %vm609, %v606, %v600
        %v616 = vlaneseq
        %v617 = vshrl.u32 %v616, 7
        %v618 = vsub.s32 0, %v617
        %v619 = vrot.slane %v597, %v618
        %v620 = vlaneseq
        %v621 = vshrl.u32 %v620, 7
        %v622 = vsub.s32 4, %v621
        %v623 = vrot.slane %v597, %v622
        %v624 = vlaneseq
        %v625 = vshrl.u32 %v624, 7
        %v626 = vsub.s32 0, %v625
        %v627 = vrot.slane %v598, %v626
        %v628 = vlaneseq
        %v629 = vshrl.u32 %v628, 7
        %v630 = vsub.s32 4, %v629
        %v631 = vrot.slane %v598, %v630
        %v636 = vlaneseq
        %v637 = vshrl.u32 %v636, 7
        %v638 = vsub.s32 0, %v637
        %v639 = vrot.slane %v619, %v638
        %v640 = vlaneseq
        %v641 = vshrl.u32 %v640, 7
        %v642 = vsub.s32 0, %v641
        %v643 = vrot.slane %v623, %v642
        %v644 = vlaneseq
        %v645 = vshrl.u32 %v644, 7
        %v646 = vsub.s32 0, %v645
        %v647 = vrot.slane %v627, %v646
        %v648 = vlaneseq
        %v649 = vshrl.u32 %v648, 7
        %v650 = vsub.s32 0, %v649
        %v651 = vrot.slane %v631, %v650
        %v652 = vmul.f32 %v613, %v639
        %v653 = vmul.f32 %v612, %v643
        %v654 = vmul.f32 %v611, %v647
        %v655 = vmul.f32 %v610, %v651
        %656 = vrot.lane.b32.xlu0 %v593, 127
        %v657 = vpop.permute.xlu0 %656
        %658 = vrot.lane.b32.xlu0 %v594, 127
        %v659 = vpop.permute.xlu0 %658
        %660 = vrot.lane.b32.xlu0 %v595, 127
        %v661 = vpop.permute.xlu0 %660
        %662 = vrot.lane.b32.xlu0 %v596, 127
        %v663 = vpop.permute.xlu0 %662
        %vm664 = vcmp.lt.s32.totalorder %v608, 127
        %v665 = vsel %vm664, %v661, %v663
        %v666 = vsel %vm664, %v659, %v661
        %v667 = vsel %vm664, %v657, %v659
        %v668 = vsel %vm664, %v663, %v657
        %v669 = vlaneseq
        %v670 = vshrl.u32 %v669, 7
        %v671 = vsub.s32 2, %v670
        %v672 = vrot.slane %v597, %v671
        %v673 = vlaneseq
        %v674 = vshrl.u32 %v673, 7
        %v675 = vsub.s32 6, %v674
        %v676 = vrot.slane %v597, %v675
        %v677 = vlaneseq
        %v678 = vshrl.u32 %v677, 7
        %v679 = vsub.s32 2, %v678
        %v680 = vrot.slane %v598, %v679
        %v681 = vlaneseq
        %v682 = vshrl.u32 %v681, 7
        %v683 = vsub.s32 6, %v682
        %v684 = vrot.slane %v598, %v683
        %v689 = vlaneseq
        %v690 = vshrl.u32 %v689, 7
        %v691 = vsub.s32 2, %v690
        %v692 = vrot.slane %v672, %v691
        %v693 = vlaneseq
        %v694 = vshrl.u32 %v693, 7
        %v695 = vsub.s32 2, %v694
        %v696 = vrot.slane %v676, %v695
        %v697 = vlaneseq
        %v698 = vshrl.u32 %v697, 7
        %v699 = vsub.s32 2, %v698
        %v700 = vrot.slane %v680, %v699
        %v701 = vlaneseq
        %v702 = vshrl.u32 %v701, 7
        %v703 = vsub.s32 2, %v702
        %v704 = vrot.slane %v684, %v703
        %v705 = vmul.f32 %v667, %v692
        %v706 = vmul.f32 %v666, %v696
        %v707 = vmul.f32 %v665, %v700
        %v708 = vmul.f32 %v668, %v704
        %v709 = vld [vmem:[%s2] sm:$0xff]
        %v710 = vld [vmem:[%s2 + $0x8] sm:$0xff]
        %712 = vset.pattern.permute.xlu0 0
        %713 = vperm.xlu0 %712, %v295
        %v714 = vpop.permute.xlu0 %713
        %717 = vset.pattern.permute.xlu0 0
        %718 = vperm.xlu0 %717, %v296
        %v719 = vpop.permute.xlu0 %718
        %vm721 = vcmask 195584
        %v723 = vsel %vm721, %v709, 0
        %v726 = vsel %vm721, %v710, 0
        %728 = vmatprep.subr.mxu0 0.0
        %729 = vmatpush1.msra.mxu0 0.0
        %730 = vmatprep.subr.mxu0 0.0
        %731 = vmatpush1.msra.mxu0 0.0
        %732 = vmatprep.subr.mxu0 0.0
        %733 = vmatpush1.msra.mxu0 0.0
        %734 = vmatprep.subr.mxu0 0.0
        %735 = vmatpush1.msra.mxu0 0.0
        %736 = vmatprep.subr.mxu0 0.0
        %737 = vmatpush1.msra.mxu0 0.0
        %738 = vmatprep.subr.mxu0 0.0
        %739 = vmatpush1.msra.mxu0 0.0
        %740 = vmatprep.subr.mxu0 0.0
        %741 = vmatpush1.msra.mxu0 0.0
        %742 = vmatprep.subr.mxu0 0.0
        %743 = vmatpush1.msra.mxu0 0.0
        %744 = vmatprep.subr.mxu0 0.0
        %745 = vmatpush1.msra.mxu0 0.0
        %746 = vmatprep.subr.mxu0 0.0
        %747 = vmatpush1.msra.mxu0 0.0
        %748 = vmatprep.subr.mxu0 0.0
        %749 = vmatpush1.msra.mxu0 0.0
        %750 = vmatprep.subr.mxu0 0.0
        %751 = vmatpush1.msra.mxu0 0.0
        %752 = vmatprep.subr.mxu0 0.0
        %753 = vmatpush1.msra.mxu0 0.0
        %754 = vmatprep.subr.mxu0 %v706
        %755 = vmatpush1.msra.mxu0 %v705
        %756 = vmatprep.subr.mxu0 %v594
        %757 = vmatpush1.msra.mxu0 %v593
        %758 = vmatprep.subr.mxu0 %v653
        %759 = vmatpush1.msra.mxu0 %v652
        %760 = vmatprep.subr.mxu0 0.0
        %761 = vmatpush2.msra.mxu0 0.0
        %762 = vmatprep.subr.mxu0 0.0
        %763 = vmatpush2.msra.mxu0 0.0
        %764 = vmatprep.subr.mxu0 0.0
        %765 = vmatpush2.msra.mxu0 0.0
        %766 = vmatprep.subr.mxu0 0.0
        %767 = vmatpush2.msra.mxu0 0.0
        %768 = vmatprep.subr.mxu0 0.0
        %769 = vmatpush2.msra.mxu0 0.0
        %770 = vmatprep.subr.mxu0 0.0
        %771 = vmatpush2.msra.mxu0 0.0
        %772 = vmatprep.subr.mxu0 0.0
        %773 = vmatpush2.msra.mxu0 0.0
        %774 = vmatprep.subr.mxu0 0.0
        %775 = vmatpush2.msra.mxu0 0.0
        %776 = vmatprep.subr.mxu0 0.0
        %777 = vmatpush2.msra.mxu0 0.0
        %778 = vmatprep.subr.mxu0 0.0
        %779 = vmatpush2.msra.mxu0 0.0
        %780 = vmatprep.subr.mxu0 0.0
        %781 = vmatpush2.msra.mxu0 0.0
        %782 = vmatprep.subr.mxu0 0.0
        %783 = vmatpush2.msra.mxu0 0.0
        %784 = vmatprep.subr.mxu0 0.0
        %785 = vmatpush2.msra.mxu0 0.0
        %786 = vmatprep.subr.mxu0 0.0
        %787 = vmatpush2.msra.mxu0 0.0
        %788 = vmatprep.subr.mxu0 0.0
        %789 = vmatpush2.msra.mxu0 0.0
        %790 = vmatprep.subr.mxu0 0.0
        %791 = vmatpush2.msra.mxu0 0.0
        %792 = vmatprep.mubr.f32.mxu0 0.0
        %793 = vmatmul.mubr.f32.gmra.mxu0 %v723
        %v794 = vpop.f32.mrf.mxu0
        %v795 = vadd.f32 %v714, %v794
        %v796 = vpop.f32.mrf.mxu0
        %v797 = vadd.f32 %v714, %v796
        %798 = vmatprep.mubr.f32.mxu0 0.0
        %799 = vmatmul.mubr.f32.gmra.mxu0 %v726
        %v800 = vpop.f32.mrf.mxu0
        %v801 = vadd.f32 %v719, %v800
        %v802 = vpop.f32.mrf.mxu0
        %v803 = vadd.f32 %v719, %v802
        %804 = vdwg.mxu0
        %805 = vmatprep.subr.mxu0 0.0
        %806 = vmatpush1.msra.mxu0 0.0
        %807 = vmatprep.subr.mxu0 0.0
        %808 = vmatpush1.msra.mxu0 0.0
        %809 = vmatprep.subr.mxu0 0.0
        %810 = vmatpush1.msra.mxu0 0.0
        %811 = vmatprep.subr.mxu0 0.0
        %812 = vmatpush1.msra.mxu0 0.0
        %813 = vmatprep.subr.mxu0 0.0
        %814 = vmatpush1.msra.mxu0 0.0
        %815 = vmatprep.subr.mxu0 0.0
        %816 = vmatpush1.msra.mxu0 0.0
        %817 = vmatprep.subr.mxu0 0.0
        %818 = vmatpush1.msra.mxu0 0.0
        %819 = vmatprep.subr.mxu0 0.0
        %820 = vmatpush1.msra.mxu0 0.0
        %821 = vmatprep.subr.mxu0 0.0
        %822 = vmatpush1.msra.mxu0 0.0
        %823 = vmatprep.subr.mxu0 0.0
        %824 = vmatpush1.msra.mxu0 0.0
        %825 = vmatprep.subr.mxu0 0.0
        %826 = vmatpush1.msra.mxu0 0.0
        %827 = vmatprep.subr.mxu0 0.0
        %828 = vmatpush1.msra.mxu0 0.0
        %829 = vmatprep.subr.mxu0 0.0
        %830 = vmatpush1.msra.mxu0 0.0
        %831 = vmatprep.subr.mxu0 %v708
        %832 = vmatpush1.msra.mxu0 %v707
        %833 = vmatprep.subr.mxu0 %v596
        %834 = vmatpush1.msra.mxu0 %v595
        %835 = vmatprep.subr.mxu0 %v655
        %836 = vmatpush1.msra.mxu0 %v654
        %837 = vmatprep.subr.mxu0 0.0
        %838 = vmatpush2.msra.mxu0 0.0
        %839 = vmatprep.subr.mxu0 0.0
        %840 = vmatpush2.msra.mxu0 0.0
        %841 = vmatprep.subr.mxu0 0.0
        %842 = vmatpush2.msra.mxu0 0.0
        %843 = vmatprep.subr.mxu0 0.0
        %844 = vmatpush2.msra.mxu0 0.0
        %845 = vmatprep.subr.mxu0 0.0
        %846 = vmatpush2.msra.mxu0 0.0
        %847 = vmatprep.subr.mxu0 0.0
        %848 = vmatpush2.msra.mxu0 0.0
        %849 = vmatprep.subr.mxu0 0.0
        %850 = vmatpush2.msra.mxu0 0.0
        %851 = vmatprep.subr.mxu0 0.0
        %852 = vmatpush2.msra.mxu0 0.0
        %853 = vmatprep.subr.mxu0 0.0
        %854 = vmatpush2.msra.mxu0 0.0
        %855 = vmatprep.subr.mxu0 0.0
        %856 = vmatpush2.msra.mxu0 0.0
        %857 = vmatprep.subr.mxu0 0.0
        %858 = vmatpush2.msra.mxu0 0.0
        %859 = vmatprep.subr.mxu0 0.0
        %860 = vmatpush2.msra.mxu0 0.0
        %861 = vmatprep.subr.mxu0 0.0
        %862 = vmatpush2.msra.mxu0 0.0
        %863 = vmatprep.subr.mxu0 0.0
        %864 = vmatpush2.msra.mxu0 0.0
        %865 = vmatprep.subr.mxu0 0.0
        %866 = vmatpush2.msra.mxu0 0.0
        %867 = vmatprep.subr.mxu0 0.0
        %868 = vmatpush2.msra.mxu0 0.0
        %869 = vmatprep.mubr.f32.mxu0 0.0
        %870 = vmatmul.mubr.f32.gmra.mxu0 %v723
        %v871 = vpop.f32.mrf.mxu0
        %v872 = vadd.f32 %v714, %v871
        %v873 = vpop.f32.mrf.mxu0
        %v874 = vadd.f32 %v714, %v873
        %875 = vmatprep.mubr.f32.mxu0 0.0
        %876 = vmatmul.mubr.f32.gmra.mxu0 %v726
        %v877 = vpop.f32.mrf.mxu0
        %v878 = vadd.f32 %v719, %v877
        %v879 = vpop.f32.mrf.mxu0
        %v880 = vadd.f32 %v719, %v879
        %881 = vdwg.mxu0
        %v882 = vmax.f32 %v795, 0.0
        %v883 = vmax.f32 %v797, 0.0
        %v884 = vmax.f32 %v872, 0.0
        %v885 = vmax.f32 %v874, 0.0
        %v886 = vmax.f32 %v801, 0.0
        %v887 = vmax.f32 %v803, 0.0
        %v888 = vmax.f32 %v878, 0.0
        %v889 = vmax.f32 %v880, 0.0
        %v890 = vmin.f32 %v882, 6.0
        %v891 = vmin.f32 %v883, 6.0
        %v892 = vmin.f32 %v884, 6.0
        %v893 = vmin.f32 %v885, 6.0
        %v894 = vmin.f32 %v886, 6.0
        %v895 = vmin.f32 %v887, 6.0
        %v896 = vmin.f32 %v888, 6.0
        %v897 = vmin.f32 %v889, 6.0
        %v898 = vld [vmem:[%s3] sm:$0xff]
        %v899 = vld [vmem:[%s3 + $0x8] sm:$0xff]
        %v900 = vld [vmem:[%s3 + $0x10] sm:$0xff]
        %v901 = vld [vmem:[%s3 + $0x18] sm:$0xff]
        %v902 = vld [vmem:[%s3 + $0x20] sm:$0xff]
        %v903 = vld [vmem:[%s3 + $0x28] sm:$0xff]
        %v904 = vld [vmem:[%s3 + $0x30] sm:$0xff]
        %v905 = vld [vmem:[%s3 + $0x38] sm:$0xff]
        %v907 = vsel %vm314, %v898, 0
        %v910 = vsel %vm314, %v899, 0
        %v913 = vsel %vm314, %v900, 0
        %v916 = vsel %vm314, %v901, 0
        %v919 = vsel %vm314, %v902, 0
        %v922 = vsel %vm314, %v903, 0
        %v925 = vsel %vm314, %v904, 0
        %v928 = vsel %vm314, %v905, 0
        %930 = vmatprep.subr.mxu0 0.0
        %931 = vmatpush1.msra.mxu0 0.0
        %932 = vmatprep.subr.mxu0 0.0
        %933 = vmatpush1.msra.mxu0 0.0
        %934 = vmatprep.subr.mxu0 0.0
        %935 = vmatpush1.msra.mxu0 0.0
        %936 = vmatprep.subr.mxu0 0.0
        %937 = vmatpush1.msra.mxu0 0.0
        %938 = vmatprep.subr.mxu0 0.0
        %939 = vmatpush1.msra.mxu0 0.0
        %940 = vmatprep.subr.mxu0 0.0
        %941 = vmatpush1.msra.mxu0 0.0
        %942 = vmatprep.subr.mxu0 0.0
        %943 = vmatpush1.msra.mxu0 0.0
        %944 = vmatprep.subr.mxu0 0.0
        %945 = vmatpush1.msra.mxu0 0.0
        %946 = vmatprep.subr.mxu0 0.0
        %947 = vmatpush1.msra.mxu0 0.0
        %948 = vmatprep.subr.mxu0 0.0
        %949 = vmatpush1.msra.mxu0 0.0
        %950 = vmatprep.subr.mxu0 0.0
        %951 = vmatpush1.msra.mxu0 0.0
        %952 = vmatprep.subr.mxu0 0.0
        %953 = vmatpush1.msra.mxu0 0.0
        %954 = vmatprep.subr.mxu0 0.0
        %955 = vmatpush1.msra.mxu0 0.0
        %956 = vmatprep.subr.mxu0 0.0
        %957 = vmatpush1.msra.mxu0 0.0
        %958 = vmatprep.subr.mxu0 %v895
        %959 = vmatpush1.msra.mxu0 %v894
        %960 = vmatprep.subr.mxu0 %v891
        %961 = vmatpush1.msra.mxu0 %v890
        %962 = vmatprep.subr.mxu0 0.0
        %963 = vmatpush2.msra.mxu0 0.0
        %964 = vmatprep.subr.mxu0 0.0
        %965 = vmatpush2.msra.mxu0 0.0
        %966 = vmatprep.subr.mxu0 0.0
        %967 = vmatpush2.msra.mxu0 0.0
        %968 = vmatprep.subr.mxu0 0.0
        %969 = vmatpush2.msra.mxu0 0.0
        %970 = vmatprep.subr.mxu0 0.0
        %971 = vmatpush2.msra.mxu0 0.0
        %972 = vmatprep.subr.mxu0 0.0
        %973 = vmatpush2.msra.mxu0 0.0
        %974 = vmatprep.subr.mxu0 0.0
        %975 = vmatpush2.msra.mxu0 0.0
        %976 = vmatprep.subr.mxu0 0.0
        %977 = vmatpush2.msra.mxu0 0.0
        %978 = vmatprep.subr.mxu0 0.0
        %979 = vmatpush2.msra.mxu0 0.0
        %980 = vmatprep.subr.mxu0 0.0
        %981 = vmatpush2.msra.mxu0 0.0
        %982 = vmatprep.subr.mxu0 0.0
        %983 = vmatpush2.msra.mxu0 0.0
        %984 = vmatprep.subr.mxu0 0.0
        %985 = vmatpush2.msra.mxu0 0.0
        %986 = vmatprep.subr.mxu0 0.0
        %987 = vmatpush2.msra.mxu0 0.0
        %988 = vmatprep.subr.mxu0 0.0
        %989 = vmatpush2.msra.mxu0 0.0
        %990 = vmatprep.subr.mxu0 0.0
        %991 = vmatpush2.msra.mxu0 0.0
        %992 = vmatprep.subr.mxu0 0.0
        %993 = vmatpush2.msra.mxu0 0.0
        %994 = vmatprep.mubr.f32.mxu0 0.0
        %995 = vmatmul.mubr.f32.gmra.mxu0 %v907
        %v996 = vpop.f32.mrf.mxu0
        %v997 = vadd.f32 %v415, %v996
        %v998 = vpop.f32.mrf.mxu0
        %v999 = vadd.f32 %v417, %v998
        %1000 = vmatprep.mubr.f32.mxu0 0.0
        %1001 = vmatmul.mubr.f32.gmra.mxu0 %v910
        %v1002 = vpop.f32.mrf.mxu0
        %v1003 = vadd.f32 %v421, %v1002
        %v1004 = vpop.f32.mrf.mxu0
        %v1005 = vadd.f32 %v423, %v1004
        %1006 = vmatprep.mubr.f32.mxu0 0.0
        %1007 = vmatmul.mubr.f32.gmra.mxu0 %v913
        %v1008 = vpop.f32.mrf.mxu0
        %v1009 = vadd.f32 %v427, %v1008
        %v1010 = vpop.f32.mrf.mxu0
        %v1011 = vadd.f32 %v429, %v1010
        %1012 = vmatprep.mubr.f32.mxu0 0.0
        %1013 = vmatmul.mubr.f32.gmra.mxu0 %v916
        %v1014 = vpop.f32.mrf.mxu0
        %v1015 = vadd.f32 %v433, %v1014
        %v1016 = vpop.f32.mrf.mxu0
        %v1017 = vadd.f32 %v435, %v1016
        %1018 = vmatprep.mubr.f32.mxu0 0.0
        %1019 = vmatmul.mubr.f32.gmra.mxu0 %v919
        %v1020 = vpop.f32.mrf.mxu0
        %v1021 = vadd.f32 %v439, %v1020
        %v1022 = vpop.f32.mrf.mxu0
        %v1023 = vadd.f32 %v441, %v1022
        %1024 = vmatprep.mubr.f32.mxu0 0.0
        %1025 = vmatmul.mubr.f32.gmra.mxu0 %v922
        %v1026 = vpop.f32.mrf.mxu0
        %v1027 = vadd.f32 %v445, %v1026
        %v1028 = vpop.f32.mrf.mxu0
        %v1029 = vadd.f32 %v447, %v1028
        %1030 = vmatprep.mubr.f32.mxu0 0.0
        %1031 = vmatmul.mubr.f32.gmra.mxu0 %v925
        %v1032 = vpop.f32.mrf.mxu0
        %v1033 = vadd.f32 %v451, %v1032
        %v1034 = vpop.f32.mrf.mxu0
        %v1035 = vadd.f32 %v453, %v1034
        %1036 = vmatprep.mubr.f32.mxu0 0.0
        %1037 = vmatmul.mubr.f32.gmra.mxu0 %v928
        %v1038 = vpop.f32.mrf.mxu0
        %v1039 = vadd.f32 %v457, %v1038
        %v1040 = vpop.f32.mrf.mxu0
        %v1041 = vadd.f32 %v459, %v1040
        %1042 = vdwg.mxu0
        %1043 = vmatprep.subr.mxu0 0.0
        %1044 = vmatpush1.msra.mxu0 0.0
        %1045 = vmatprep.subr.mxu0 0.0
        %1046 = vmatpush1.msra.mxu0 0.0
        %1047 = vmatprep.subr.mxu0 0.0
        %1048 = vmatpush1.msra.mxu0 0.0
        %1049 = vmatprep.subr.mxu0 0.0
        %1050 = vmatpush1.msra.mxu0 0.0
        %1051 = vmatprep.subr.mxu0 0.0
        %1052 = vmatpush1.msra.mxu0 0.0
        %1053 = vmatprep.subr.mxu0 0.0
        %1054 = vmatpush1.msra.mxu0 0.0
        %1055 = vmatprep.subr.mxu0 0.0
        %1056 = vmatpush1.msra.mxu0 0.0
        %1057 = vmatprep.subr.mxu0 0.0
        %1058 = vmatpush1.msra.mxu0 0.0
        %1059 = vmatprep.subr.mxu0 0.0
        %1060 = vmatpush1.msra.mxu0 0.0
        %1061 = vmatprep.subr.mxu0 0.0
        %1062 = vmatpush1.msra.mxu0 0.0
        %1063 = vmatprep.subr.mxu0 0.0
        %1064 = vmatpush1.msra.mxu0 0.0
        %1065 = vmatprep.subr.mxu0 0.0
        %1066 = vmatpush1.msra.mxu0 0.0
        %1067 = vmatprep.subr.mxu0 0.0
        %1068 = vmatpush1.msra.mxu0 0.0
        %1069 = vmatprep.subr.mxu0 0.0
        %1070 = vmatpush1.msra.mxu0 0.0
        %1071 = vmatprep.subr.mxu0 %v897
        %1072 = vmatpush1.msra.mxu0 %v896
        %1073 = vmatprep.subr.mxu0 %v893
        %1074 = vmatpush1.msra.mxu0 %v892
        %1075 = vmatprep.subr.mxu0 0.0
        %1076 = vmatpush2.msra.mxu0 0.0
        %1077 = vmatprep.subr.mxu0 0.0
        %1078 = vmatpush2.msra.mxu0 0.0
        %1079 = vmatprep.subr.mxu0 0.0
        %1080 = vmatpush2.msra.mxu0 0.0
        %1081 = vmatprep.subr.mxu0 0.0
        %1082 = vmatpush2.msra.mxu0 0.0
        %1083 = vmatprep.subr.mxu0 0.0
        %1084 = vmatpush2.msra.mxu0 0.0
        %1085 = vmatprep.subr.mxu0 0.0
        %1086 = vmatpush2.msra.mxu0 0.0
        %1087 = vmatprep.subr.mxu0 0.0
        %1088 = vmatpush2.msra.mxu0 0.0
        %1089 = vmatprep.subr.mxu0 0.0
        %1090 = vmatpush2.msra.mxu0 0.0
        %1091 = vmatprep.subr.mxu0 0.0
        %1092 = vmatpush2.msra.mxu0 0.0
        %1093 = vmatprep.subr.mxu0 0.0
        %1094 = vmatpush2.msra.mxu0 0.0
        %1095 = vmatprep.subr.mxu0 0.0
        %1096 = vmatpush2.msra.mxu0 0.0
        %1097 = vmatprep.subr.mxu0 0.0
        %1098 = vmatpush2.msra.mxu0 0.0
        %1099 = vmatprep.subr.mxu0 0.0
        %1100 = vmatpush2.msra.mxu0 0.0
        %1101 = vmatprep.subr.mxu0 0.0
        %1102 = vmatpush2.msra.mxu0 0.0
        %1103 = vmatprep.subr.mxu0 0.0
        %1104 = vmatpush2.msra.mxu0 0.0
        %1105 = vmatprep.subr.mxu0 0.0
        %1106 = vmatpush2.msra.mxu0 0.0
        %1107 = vmatprep.mubr.f32.mxu0 0.0
        %1108 = vmatmul.mubr.f32.gmra.mxu0 %v907
        %v1109 = vpop.f32.mrf.mxu0
        %v1110 = vadd.f32 %v534, %v1109
        %v1111 = vpop.f32.mrf.mxu0
        %v1112 = vadd.f32 %v536, %v1111
        %1113 = vmatprep.mubr.f32.mxu0 0.0
        %1114 = vmatmul.mubr.f32.gmra.mxu0 %v910
        %v1115 = vpop.f32.mrf.mxu0
        %v1116 = vadd.f32 %v540, %v1115
        %v1117 = vpop.f32.mrf.mxu0
        %v1118 = vadd.f32 %v542, %v1117
        %1119 = vmatprep.mubr.f32.mxu0 0.0
        %1120 = vmatmul.mubr.f32.gmra.mxu0 %v913
        %v1121 = vpop.f32.mrf.mxu0
        %v1122 = vadd.f32 %v546, %v1121
        %v1123 = vpop.f32.mrf.mxu0
        %v1124 = vadd.f32 %v548, %v1123
        %1125 = vmatprep.mubr.f32.mxu0 0.0
        %1126 = vmatmul.mubr.f32.gmra.mxu0 %v916
        %v1127 = vpop.f32.mrf.mxu0
        %v1128 = vadd.f32 %v552, %v1127
        %v1129 = vpop.f32.mrf.mxu0
        %v1130 = vadd.f32 %v554, %v1129
        %1131 = vmatprep.mubr.f32.mxu0 0.0
        %1132 = vmatmul.mubr.f32.gmra.mxu0 %v919
        %v1133 = vpop.f32.mrf.mxu0
        %v1134 = vadd.f32 %v558, %v1133
        %v1135 = vpop.f32.mrf.mxu0
        %v1136 = vadd.f32 %v560, %v1135
        %1137 = vmatprep.mubr.f32.mxu0 0.0
        %1138 = vmatmul.mubr.f32.gmra.mxu0 %v922
        %v1139 = vpop.f32.mrf.mxu0
        %v1140 = vadd.f32 %v564, %v1139
        %v1141 = vpop.f32.mrf.mxu0
        %v1142 = vadd.f32 %v566, %v1141
        %1143 = vmatprep.mubr.f32.mxu0 0.0
        %1144 = vmatmul.mubr.f32.gmra.mxu0 %v925
        %v1145 = vpop.f32.mrf.mxu0
        %v1146 = vadd.f32 %v570, %v1145
        %v1147 = vpop.f32.mrf.mxu0
        %v1148 = vadd.f32 %v572, %v1147
        %1149 = vmatprep.mubr.f32.mxu0 0.0
        %1150 = vmatmul.mubr.f32.gmra.mxu0 %v928
        %v1151 = vpop.f32.mrf.mxu0
        %v1152 = vadd.f32 %v576, %v1151
        %v1153 = vpop.f32.mrf.mxu0
        %v1154 = vadd.f32 %v578, %v1153
        %1155 = vdwg.mxu0
        %1157 = vset.pattern.permute.xlu0 0
        %1158 = vperm.xlu0 %1157, %v297
        %v1159 = vpop.permute.xlu0 %1158
        %1162 = vset.pattern.permute.xlu0 0
        %1163 = vperm.xlu0 %1162, %v298
        %v1164 = vpop.permute.xlu0 %1163
        %1167 = vset.pattern.permute.xlu0 0
        %1168 = vperm.xlu0 %1167, %v299
        %v1169 = vpop.permute.xlu0 %1168
        %1172 = vset.pattern.permute.xlu0 0
        %1173 = vperm.xlu0 %1172, %v300
        %v1174 = vpop.permute.xlu0 %1173
        %1177 = vset.pattern.permute.xlu0 0
        %1178 = vperm.xlu0 %1177, %v301
        %v1179 = vpop.permute.xlu0 %1178
        %1182 = vset.pattern.permute.xlu0 0
        %1183 = vperm.xlu0 %1182, %v302
        %v1184 = vpop.permute.xlu0 %1183
        %1187 = vset.pattern.permute.xlu0 0
        %1188 = vperm.xlu0 %1187, %v303
        %v1189 = vpop.permute.xlu0 %1188
        %1192 = vset.pattern.permute.xlu0 0
        %1193 = vperm.xlu0 %1192, %v304
        %v1194 = vpop.permute.xlu0 %1193
        %v1196 = vadd.f32 %v997, %v1159
        %v1197 = vadd.f32 %v999, %v1159
        %v1198 = vadd.f32 %v1110, %v1159
        %v1199 = vadd.f32 %v1112, %v1159
        %v1200 = vadd.f32 %v1003, %v1164
        %v1201 = vadd.f32 %v1005, %v1164
        %v1202 = vadd.f32 %v1116, %v1164
        %v1203 = vadd.f32 %v1118, %v1164
        %v1204 = vadd.f32 %v1009, %v1169
        %v1205 = vadd.f32 %v1011, %v1169
        %v1206 = vadd.f32 %v1122, %v1169
        %v1207 = vadd.f32 %v1124, %v1169
        %v1208 = vadd.f32 %v1015, %v1174
        %v1209 = vadd.f32 %v1017, %v1174
        %v1210 = vadd.f32 %v1128, %v1174
        %v1211 = vadd.f32 %v1130, %v1174
        %v1212 = vadd.f32 %v1021, %v1179
        %v1213 = vadd.f32 %v1023, %v1179
        %v1214 = vadd.f32 %v1134, %v1179
        %v1215 = vadd.f32 %v1136, %v1179
        %v1216 = vadd.f32 %v1027, %v1184
        %v1217 = vadd.f32 %v1029, %v1184
        %v1218 = vadd.f32 %v1140, %v1184
        %v1219 = vadd.f32 %v1142, %v1184
        %v1220 = vadd.f32 %v1033, %v1189
        %v1221 = vadd.f32 %v1035, %v1189
        %v1222 = vadd.f32 %v1146, %v1189
        %v1223 = vadd.f32 %v1148, %v1189
        %v1224 = vadd.f32 %v1039, %v1194
        %v1225 = vadd.f32 %v1041, %v1194
        %v1226 = vadd.f32 %v1152, %v1194
        %v1227 = vadd.f32 %v1154, %v1194
        %v1228 = vmax.f32 %v1196, 0.0
        %v1229 = vmax.f32 %v1197, 0.0
        %v1230 = vmax.f32 %v1198, 0.0
        %v1231 = vmax.f32 %v1199, 0.0
        %v1232 = vmax.f32 %v1200, 0.0
        %v1233 = vmax.f32 %v1201, 0.0
        %v1234 = vmax.f32 %v1202, 0.0
        %v1235 = vmax.f32 %v1203, 0.0
        %v1236 = vmax.f32 %v1204, 0.0
        %v1237 = vmax.f32 %v1205, 0.0
        %v1238 = vmax.f32 %v1206, 0.0
        %v1239 = vmax.f32 %v1207, 0.0
        %v1240 = vmax.f32 %v1208, 0.0
        %v1241 = vmax.f32 %v1209, 0.0
        %v1242 = vmax.f32 %v1210, 0.0
        %v1243 = vmax.f32 %v1211, 0.0
        %v1244 = vmax.f32 %v1212, 0.0
        %v1245 = vmax.f32 %v1213, 0.0
        %v1246 = vmax.f32 %v1214, 0.0
        %v1247 = vmax.f32 %v1215, 0.0
        %v1248 = vmax.f32 %v1216, 0.0
        %v1249 = vmax.f32 %v1217, 0.0
        %v1250 = vmax.f32 %v1218, 0.0
        %v1251 = vmax.f32 %v1219, 0.0
        %v1252 = vmax.f32 %v1220, 0.0
        %v1253 = vmax.f32 %v1221, 0.0
        %v1254 = vmax.f32 %v1222, 0.0
        %v1255 = vmax.f32 %v1223, 0.0
        %v1256 = vmax.f32 %v1224, 0.0
        %v1257 = vmax.f32 %v1225, 0.0
        %v1258 = vmax.f32 %v1226, 0.0
        %v1259 = vmax.f32 %v1227, 0.0
        %v1260 = vmin.f32 %v1228, 6.0
        %v1261 = vmin.f32 %v1229, 6.0
        %v1262 = vmin.f32 %v1230, 6.0
        %v1263 = vmin.f32 %v1231, 6.0
        %v1264 = vmin.f32 %v1232, 6.0
        %v1265 = vmin.f32 %v1233, 6.0
        %v1266 = vmin.f32 %v1234, 6.0
        %v1267 = vmin.f32 %v1235, 6.0
        %v1268 = vmin.f32 %v1236, 6.0
        %v1269 = vmin.f32 %v1237, 6.0
        %v1270 = vmin.f32 %v1238, 6.0
        %v1271 = vmin.f32 %v1239, 6.0
        %v1272 = vmin.f32 %v1240, 6.0
        %v1273 = vmin.f32 %v1241, 6.0
        %v1274 = vmin.f32 %v1242, 6.0
        %v1275 = vmin.f32 %v1243, 6.0
        %v1276 = vmin.f32 %v1244, 6.0
        %v1277 = vmin.f32 %v1245, 6.0
        %v1278 = vmin.f32 %v1246, 6.0
        %v1279 = vmin.f32 %v1247, 6.0
        %v1280 = vmin.f32 %v1248, 6.0
        %v1281 = vmin.f32 %v1249, 6.0
        %v1282 = vmin.f32 %v1250, 6.0
        %v1283 = vmin.f32 %v1251, 6.0
        %v1284 = vmin.f32 %v1252, 6.0
        %v1285 = vmin.f32 %v1253, 6.0
        %v1286 = vmin.f32 %v1254, 6.0
        %v1287 = vmin.f32 %v1255, 6.0
        %v1288 = vmin.f32 %v1256, 6.0
        %v1289 = vmin.f32 %v1257, 6.0
        %v1290 = vmin.f32 %v1258, 6.0
        %v1291 = vmin.f32 %v1259, 6.0
        %1292 = vst [vmem:[%s283] sm:$0xff] %v1260
        %1293 = vst [vmem:[%s283 + $0x8] sm:$0xff] %v1261
        %1294 = vst [vmem:[%s283 + $0x10] sm:$0xff] %v1262
        %1295 = vst [vmem:[%s283 + $0x18] sm:$0xff] %v1263
        %1296 = vst [vmem:[%s283 + $0x20] sm:$0xff] %v1264
        %1297 = vst [vmem:[%s283 + $0x28] sm:$0xff] %v1265
        %1298 = vst [vmem:[%s283 + $0x30] sm:$0xff] %v1266
        %1299 = vst [vmem:[%s283 + $0x38] sm:$0xff] %v1267
        %1300 = vst [vmem:[%s283 + $0x40] sm:$0xff] %v1268
        %1301 = vst [vmem:[%s283 + $0x48] sm:$0xff] %v1269
        %1302 = vst [vmem:[%s283 + $0x50] sm:$0xff] %v1270
        %1303 = vst [vmem:[%s283 + $0x58] sm:$0xff] %v1271
        %1304 = vst [vmem:[%s283 + $0x60] sm:$0xff] %v1272
        %1305 = vst [vmem:[%s283 + $0x68] sm:$0xff] %v1273
        %1306 = vst [vmem:[%s283 + $0x70] sm:$0xff] %v1274
        %1307 = vst [vmem:[%s283 + $0x78] sm:$0xff] %v1275
        %1308 = vst [vmem:[%s283 + $0x80] sm:$0xff] %v1276
        %1309 = vst [vmem:[%s283 + $0x88] sm:$0xff] %v1277
        %1310 = vst [vmem:[%s283 + $0x90] sm:$0xff] %v1278
        %1311 = vst [vmem:[%s283 + $0x98] sm:$0xff] %v1279
        %1312 = vst [vmem:[%s283 + $0xa0] sm:$0xff] %v1280
        %1313 = vst [vmem:[%s283 + $0xa8] sm:$0xff] %v1281
        %1314 = vst [vmem:[%s283 + $0xb0] sm:$0xff] %v1282
        %1315 = vst [vmem:[%s283 + $0xb8] sm:$0xff] %v1283
        %1316 = vst [vmem:[%s283 + $0xc0] sm:$0xff] %v1284
        %1317 = vst [vmem:[%s283 + $0xc8] sm:$0xff] %v1285
        %1318 = vst [vmem:[%s283 + $0xd0] sm:$0xff] %v1286
        %1319 = vst [vmem:[%s283 + $0xd8] sm:$0xff] %v1287
        %1320 = vst [vmem:[%s283 + $0xe0] sm:$0xff] %v1288
        %1321 = vst [vmem:[%s283 + $0xe8] sm:$0xff] %v1289
        %1322 = vst [vmem:[%s283 + $0xf0] sm:$0xff] %v1290
        %1323 = vst [vmem:[%s283 + $0xf8] sm:$0xff] %v1291
        %s1324 = sand.u32 %s159, 1
        %s1325 = scalar_lea.sflag [#allocation4], %s1324
        %s1326 = sand.u32 %s159, 1
        %s1327 = smul.addr %s1326, 256
        %s1328 = scalar_lea.vmem [#allocation3], %s1327
        // Predicated region
        $region68: #{tpu_custom_call.1} parent=62 // pred_check
          %p1329 = pneg %p169
        $region69: #{tpu_custom_call.1} parent=62 // pred_check_branch
          %1331 = sbr.rel (%p1329) target = $region71
        $region70: #{tpu_custom_call.1} parent=62 // pred_region
          %s1332 = smul.u32 4, %s20
          %s1334 = ssub.s32 4096, 4096
          %1335 = vsyncadd %s1325, %s1334
          %s1336 = smul.addr %s1332, 128
          %s1337 = scalar_lea.hbm %s6, %s1336
          %s1338 = sshll.u32 %s1328, 4
          %s1339 = int_to_ptr.vmem [resolvable:$true] %s1338
          %1344 = dma.vmem_to_hbm [thread:$0]  %s1339, 4096, %s1337, %s1325, 512, 1024, 32
        $region71: #{tpu_custom_call.1} parent=62 // pred_fallthru
          _
      $region63: #{tpu_custom_call.1} parent=5 // pred_fallthru
        _
      %p1345 = scmp.le.s32.totalorder 2, %s15
      // Predicated region
      $region72: #{tpu_custom_call.1} parent=5 // pred_check
        %p1346 = pneg %p1345
      $region73: #{tpu_custom_call.1} parent=5 // pred_check_branch
        %1348 = sbr.rel (%p1346) target = $region75
      $region74: #{tpu_custom_call.1} parent=5 // pred_region
        %s1349 = ssub.s32 %s15, 2
        // Predicated region
        $region76: #{tpu_custom_call.1} parent=74 // pred_check
          %p1350 = pneg %p175
        $region77: #{tpu_custom_call.1} parent=74 // pred_check_branch
          %1352 = sbr.rel (%p1350) target = $region79
        $region78: #{tpu_custom_call.1} parent=74 // pred_region
          %s1353 = sand.u32 %s160, 1
          %s1354 = scalar_lea.sflag [#allocation4], %s1353
          %s1355 = sand.u32 %s160, 1
          %s1356 = smul.addr %s1355, 256
          %s1357 = scalar_lea.vmem [#allocation3], %s1356
          %1358 = dma.done %s1354, 4096
        $region79: #{tpu_custom_call.1} parent=74 // pred_fallthru
          _
      $region75: #{tpu_custom_call.1} parent=5 // pred_fallthru
        _
    $region6: #{tpu_custom_call.1} parent=1 // loop_footer
      %s19 = sadd.s32 1, %s15
    $region7: #{tpu_custom_call.1} parent=1 // loop_footer_branch
      %14 = sbr.rel target = $region3
    $region8: #{tpu_custom_call.1} parent=1 // loop_exit
      _
    %1359 = vsyncpa [#allocation4], 1
    %s1360 = scalar_lea.sflag [#allocation4], 1
    %1361 = vsyncpa %s1360, 1

</llo_original>
